<compile_context>
chip_gen: v6e
topology: v6e:2x2x1
jax: 0.10.0
libtpu: 0.0.40
codegen_flags: <defaults>
</compile_context>

<pallas_src>
import numpy as np
import jax
import jax.numpy as jnp
from jax.experimental import pallas as pl
from jax.experimental.pallas import tpu as pltpu

# ----------------------------- small config ---------------------------------
BATCH = 256          # total rows in the example run (small: 256*4*16 f32 = 64 KB)
TILE_B = 128         # rows per grid step -> fills MXU M, grid amortizes slab DMA
L = 16               # lookback_horizon
H = 8                # forecast_size
F = 4                # feature_dim
HIDDEN = 32          # hidden_size
NUM_BLOCKS = 3       # num_nhits_blocks
MLP_LAYERS = 2       # mlp_layer_num
POOL_K = [2, 2, 2]   # pooling_kernel_size
RATIOS = [4, 2, 1]   # downsampling_ratios

D_IN = F * L         # flattened lookback  (64)
D_OUT = F * H        # flattened forecast  (32)
LANES = 128          # every in-kernel tile is 128 lanes wide

assert len(set(POOL_K)) == 1, "scatter-fold requires equal pooling sizes"
K = POOL_K[0]
assert K == 2, "lane layout below assumes pooling kernel size 2"
assert L % K == 0, "maxpool must not cross feature boundaries"
D_POOL = D_IN // K   # 32
PH1_OFF = 64         # lane offset of pool phase 1 / scattered backcast phase 1
FC_OFF = D_POOL      # 32: forecast occupies lanes [32, 32 + D_OUT)
assert FC_OFF + D_OUT <= PH1_OFF and PH1_OFF + D_POOL <= LANES and D_IN <= LANES

ALIGN_W = 16         # bf16 sublane tile (16, 128)
ALIGN_B = 8          # f32  sublane tile ( 8, 128)


def _align(n, a):
    return -(-n // a) * a


# --------------------------- static slab layouts ------------------------------
# bf16 weight slab: shared pool-phase scatter, then per block w0..w_{M-1}, wh.
W_LAYOUT = {}
_wr = 0
W_LAYOUT["sel"] = (_wr, D_IN, LANES)
_wr += _align(D_IN, ALIGN_W)
for _blk in range(NUM_BLOCKS):
    _dims = [D_POOL] + [HIDDEN] * MLP_LAYERS
    for _l in range(MLP_LAYERS):
        W_LAYOUT[(_blk, f"w{_l}")] = (_wr, _dims[_l], _dims[_l + 1])
        _wr += _align(_dims[_l], ALIGN_W)
    W_LAYOUT[(_blk, "wh")] = (_wr, HIDDEN, LANES)
    _wr += _align(HIDDEN, ALIGN_W)
W_ROWS = _align(_wr, ALIGN_W)

# f32 bias slab: per block b0..b_{M-1}, bh (each one 8-row aligned slot).
B_LAYOUT = {}
_br = 0
for _blk in range(NUM_BLOCKS):
    for _l in range(MLP_LAYERS):
        B_LAYOUT[(_blk, f"b{_l}")] = (_br, HIDDEN)
        _br += ALIGN_B
    B_LAYOUT[(_blk, "bh")] = (_br, LANES)
    _br += ALIGN_B
B_ROWS = _align(_br, ALIGN_B)


# ----------------------------- glue helpers ---------------------------------
def linear_interp_matrix(n, size):
    """M (n, size) with x @ M == F.interpolate(x, size, mode='linear', align_corners=False)."""
    M = np.zeros((n, size), dtype=np.float32)
    for j in range(size):
        pos = (j + 0.5) * n / size - 0.5
        pos = min(max(pos, 0.0), n - 1)
        i0 = int(np.floor(pos))
        i1 = min(i0 + 1, n - 1)
        w = pos - i0
        M[i0, j] += 1.0 - w
        M[i1, j] += w
    return M


def init_params(key):
    """Returns (bf16 weight slab, f32 bias slab, per-block params for the reference)."""
    w_slab = np.zeros((W_ROWS, LANES), np.float32)
    b_slab = np.zeros((B_ROWS, LANES), np.float32)

    # Pool-phase scatter: cand[:, i] = res[:, 2i], cand[:, 64+i] = res[:, 2i+1].
    sel = np.zeros((D_IN, LANES), np.float32)
    for i in range(D_POOL):
        sel[2 * i, i] = 1.0
        sel[2 * i + 1, PH1_OFF + i] = 1.0
    row, nr, _ = W_LAYOUT["sel"]
    w_slab[row:row + nr, :] = sel

    ref_blocks = []
    for blk in range(NUM_BLOCKS):
        ds = RATIOS[blk]
        bc_size = F * L // ds
        fc_size = F * H // ds
        dims = [D_POOL] + [HIDDEN] * MLP_LAYERS

        # --- MLP parameters (Linear + ReLU, dropout_prob=0.0) ---
        # NOTE: scaled-normal init, not PyTorch's Kaiming-uniform default (real
        # checkpoint weights would be packed into the slabs the same way).
        mlp = []
        for l in range(MLP_LAYERS):
            key, k1, k2 = jax.random.split(key, 3)
            w = np.asarray(jax.random.normal(k1, (dims[l], dims[l + 1]), jnp.float32)) \
                * np.float32(1.0 / np.sqrt(dims[l]))
            b = np.asarray(jax.random.normal(k2, (1, dims[l + 1]), jnp.float32)) * np.float32(0.01)
            mlp.append((w, b))
            row, nr, nc = W_LAYOUT[(blk, f"w{l}")]
            w_slab[row:row + nr, :nc] = w
            row, nc = B_LAYOUT[(blk, f"b{l}")]
            b_slab[row, :nc] = b[0]

        # --- heads, with MultiInterpolater folded in:  (h@w + b)@M == h@(w@M) + b@M ---
        key, k1, k2, k3, k4 = jax.random.split(key, 5)
        wbc = np.asarray(jax.random.normal(k1, (HIDDEN, bc_size), jnp.float32)) * np.float32(1.0 / np.sqrt(HIDDEN))
        bbc = np.asarray(jax.random.normal(k2, (1, bc_size), jnp.float32)) * np.float32(0.01)
        wfc = np.asarray(jax.random.normal(k3, (HIDDEN, fc_size), jnp.float32)) * np.float32(1.0 / np.sqrt(HIDDEN))
        bfc = np.asarray(jax.random.normal(k4, (1, fc_size), jnp.float32)) * np.float32(0.01)

        ibc = np.kron(np.eye(F, dtype=np.float32), linear_interp_matrix(L // ds, L))  # (bc_size, F*L)
        ifc = np.kron(np.eye(F, dtype=np.float32), linear_interp_matrix(H // ds, H))  # (fc_size, F*H)
        wbc_f = (wbc @ ibc).astype(np.float32)   # (HIDDEN, D_IN)
        bbc_f = (bbc @ ibc).astype(np.float32)   # (1, D_IN)
        wfc_f = (wfc @ ifc).astype(np.float32)   # (HIDDEN, D_OUT)
        bfc_f = (bfc @ ifc).astype(np.float32)   # (1, D_OUT)

        # Fold the pool scatter into the backcast head (exact: sel is 0/1 permutation),
        # then drop the forecast into the spare lane slot [32, 64).
        wh = wbc_f @ sel                          # (HIDDEN, 128), phases at [0,32) & [64,96)
        bh = bbc_f @ sel                          # (1, 128)
        wh[:, FC_OFF:FC_OFF + D_OUT] = wfc_f
        bh[:, FC_OFF:FC_OFF + D_OUT] = bfc_f

        row, nr, _ = W_LAYOUT[(blk, "wh")]
        w_slab[row:row + nr, :] = wh
        row, _ = B_LAYOUT[(blk, "bh")]
        b_slab[row, :] = bh[0]

        ref_blocks.append(dict(
            mlp=[(jnp.asarray(w), jnp.asarray(b)) for (w, b) in mlp],
            wbc=jnp.asarray(wbc_f), bbc=jnp.asarray(bbc_f),
            wfc=jnp.asarray(wfc_f), bfc=jnp.asarray(bfc_f),
        ))

    return (jnp.asarray(w_slab, dtype=jnp.bfloat16),   # weights stored bf16
            jnp.asarray(b_slab),                        # biases stay f32
            ref_blocks)


# ------------------------------ Pallas kernel --------------------------------
def nhits_kernel(x_ref, w_ref, b_ref, out_ref):
    x = x_ref[...]                                   # (TILE_B, D_IN) f32 input tile
    row, nr, _ = W_LAYOUT["sel"]
    sel = w_ref[row:row + nr, :]                     # (D_IN, 128) bf16 0/1 scatter

    # Residual stream in scattered pool-phase space (single scatter matmul on input).
    cand = jnp.dot(x.astype(jnp.bfloat16), sel,
                   preferred_element_type=jnp.float32)        # (TILE_B, 128) f32
    acc = jnp.zeros_like(cand)                                # forecast accumulator

    for blk in range(NUM_BLOCKS):
        # --- MaxPool1d(k=2) over time: VPU max of the two pre-scattered phases ---
        pooled = jnp.maximum(cand[:, :D_POOL],
                             cand[:, PH1_OFF:PH1_OFF + D_POOL])   # (TILE_B, 32)

        # --- MLP ('flatten' multi_method; dropout_prob=0.0 -> no-op) ---
        h = pooled
        for l in range(MLP_LAYERS):
            row, nr, nc = W_LAYOUT[(blk, f"w{l}")]
            w = w_ref[row:row + nr, :nc]                          # bf16, no cast
            row, nc = B_LAYOUT[(blk, f"b{l}")]
            b = b_ref[row:row + 1, :nc]                           # f32 bias
            h = jnp.maximum(
                jnp.dot(h.astype(jnp.bfloat16), w,
                        preferred_element_type=jnp.float32) + b, 0.0)

        # --- fused head: scattered backcast @ lanes [0,32)+[64,96), forecast @ [32,64) ---
        row, nr, _ = W_LAYOUT[(blk, "wh")]
        wh = w_ref[row:row + nr, :]                               # (HIDDEN, 128) bf16
        row, _ = B_LAYOUT[(blk, "bh")]
        bh = b_ref[row:row + 1, :]                                # (1, 128) f32
        ho = jnp.dot(h.astype(jnp.bfloat16), wh,
                     preferred_element_type=jnp.float32) + bh     # (TILE_B, 128)

        acc = acc + ho                   # full-lane add; non-forecast lanes ignored
        if blk < NUM_BLOCKS - 1:
            cand = cand - ho             # residual update stays in scattered space

    out_ref[...] = acc                   # full 128-lane (unmasked) store


# ------------------------------ wrapper --------------------------------------
@jax.jit
def nhits_forward(x, w_slab, b_slab):
    """x: (B, F, L) -> forecast (B, F, H)."""
    Bt, F_, L_ = x.shape
    assert F_ == F and L_ == L
    x2d = x.reshape(Bt, F_ * L_)
    pad = (-Bt) % TILE_B
    if pad:
        x2d = jnp.pad(x2d, ((0, pad), (0, 0)))
    Bp = Bt + pad

    out = pl.pallas_call(
        nhits_kernel,
        out_shape=jax.ShapeDtypeStruct((Bp, LANES), jnp.float32),
        grid=(Bp // TILE_B,),
        in_specs=[
            pl.BlockSpec((TILE_B, D_IN), lambda g: (g, 0)),       # batch tile
            pl.BlockSpec((W_ROWS, LANES), lambda g: (0, 0)),      # bf16 weights, resident
            pl.BlockSpec((B_ROWS, LANES), lambda g: (0, 0)),      # f32 biases, resident
        ],
        out_specs=pl.BlockSpec((TILE_B, LANES), lambda g: (g, 0)),
        compiler_params=pltpu.CompilerParams(
            dimension_semantics=("parallel",)),                   # v7x: split tiles over 2 TCs
    )(x2d, w_slab, b_slab)
    return out[:Bt, FC_OFF:FC_OFF + D_OUT].reshape(Bt, F, H)


# ------------------------------ pure-JAX reference ---------------------------
def _mxu_dot(a, b):
    # Same precision policy as the kernel: bf16 MXU inputs, f32 accumulation.
    return jnp.dot(a.astype(jnp.bfloat16), b.astype(jnp.bfloat16),
                   preferred_element_type=jnp.float32)


def nhits_ref(x2d, ref_blocks):
    # Mirror the kernel's single bf16 rounding of the input (the scatter matmul).
    res = x2d.astype(jnp.bfloat16).astype(jnp.float32)
    acc = jnp.zeros((x2d.shape[0], D_OUT), jnp.float32)
    for p in ref_blocks:
        pooled = jnp.max(res.reshape(res.shape[0], D_POOL, K), axis=-1)
        h = pooled
        for w, b in p["mlp"]:
            h = jnp.maximum(_mxu_dot(h, w) + b, 0.0)
        bc = _mxu_dot(h, p["wbc"]) + p["bbc"]     # (B, D_IN)
        fc = _mxu_dot(h, p["wfc"]) + p["bfc"]     # (B, D_OUT)
        res = res - bc
        acc = acc + fc
    return acc


# ------------------------------ main ------------------------------------------
if __name__ == "__main__":
    key = jax.random.PRNGKey(0)
    kx, kp = jax.random.split(key)
    x = jax.random.normal(kx, (BATCH, F, L), jnp.float32)
    w_slab, b_slab, ref_blocks = init_params(kp)

    out = jax.block_until_ready(nhits_forward(x, w_slab, b_slab))
    assert out.shape == (BATCH, F, H)

    ref = nhits_ref(x.reshape(BATCH, F * L), ref_blocks).reshape(BATCH, F, H)
    err = float(jnp.max(jnp.abs(out - ref)))
    assert err < 1e-2, f"kernel/reference mismatch: max abs err = {err}"

    print("KERNEL_OK")
</pallas_src>

<mosaic_0001>
module attributes {stable_mosaic.version = 11 : i64} {
  func.func @nhits_kernel(%arg0: i32, %arg1: memref<128x64xf32, #tpu.memory_space<vmem>>, %arg2: memref<352x128xbf16, #tpu.memory_space<vmem>>, %arg3: memref<72x128xf32, #tpu.memory_space<vmem>>, %arg4: memref<128x128xf32, #tpu.memory_space<vmem>>) attributes {dimension_semantics = [#tpu.dimension_semantics<parallel>], iteration_bounds = array<i64: 2>, scalar_prefetch = 0 : i64, scratch_operands = 0 : i64, tpu.core_type = #tpu.core_type<tc>, window_params = [{transform_indices = @transform_0, window_bounds = array<i64: 128, 64>}, {pipeline_mode = #tpu.pipeline_mode<synchronous>, transform_indices = @transform_1, window_bounds = array<i64: 352, 128>}, {pipeline_mode = #tpu.pipeline_mode<synchronous>, transform_indices = @transform_2, window_bounds = array<i64: 72, 128>}, {transform_indices = @transform_3, window_bounds = array<i64: 128, 128>}]} {
    %c0 = arith.constant 0 : index
    %c0_0 = arith.constant 0 : index
    %0 = vector.load %arg1[%c0, %c0_0] : memref<128x64xf32, #tpu.memory_space<vmem>>, vector<128x64xf32>
    %c0_1 = arith.constant 0 : index
    %c0_2 = arith.constant 0 : index
    %1 = vector.load %arg2[%c0_1, %c0_2] : memref<352x128xbf16, #tpu.memory_space<vmem>>, vector<64x128xbf16>
    %2 = arith.truncf %0 : vector<128x64xf32> to vector<128x64xbf16>
    %cst = arith.constant dense<0.000000e+00> : vector<128x128xf32>
    %3 = tpu.matmul %2, %1, %cst {dimension_numbers = #tpu.dot_dimension_numbers<[1], [0], [0], [1], [0, 0, 1, 1], [], []>} : vector<128x64xbf16>, vector<64x128xbf16>, vector<128x128xf32> -> vector<128x128xf32>
    %cst_3 = arith.constant 0.000000e+00 : f32
    %4 = vector.broadcast %cst_3 : f32 to vector<128x128xf32>
    %5 = vector.extract_strided_slice %3 {offsets = [0, 0], sizes = [128, 32], strides = [1, 1]} : vector<128x128xf32> to vector<128x32xf32>
    %6 = vector.extract_strided_slice %3 {offsets = [0, 64], sizes = [128, 32], strides = [1, 1]} : vector<128x128xf32> to vector<128x32xf32>
    %7 = arith.maximumf %5, %6 : vector<128x32xf32>
    %c64 = arith.constant 64 : index
    %c0_4 = arith.constant 0 : index
    %8 = vector.load %arg2[%c64, %c0_4] : memref<352x128xbf16, #tpu.memory_space<vmem>>, vector<32x32xbf16>
    %c0_5 = arith.constant 0 : index
    %c0_6 = arith.constant 0 : index
    %9 = vector.load %arg3[%c0_5, %c0_6] : memref<72x128xf32, #tpu.memory_space<vmem>>, vector<1x32xf32>
    %10 = arith.truncf %7 : vector<128x32xf32> to vector<128x32xbf16>
    %cst_7 = arith.constant dense<0.000000e+00> : vector<128x32xf32>
    %11 = tpu.matmul %10, %8, %cst_7 {dimension_numbers = #tpu.dot_dimension_numbers<[1], [0], [0], [1], [0, 0, 1, 1], [], []>} : vector<128x32xbf16>, vector<32x32xbf16>, vector<128x32xf32> -> vector<128x32xf32>
    %12 = vector.broadcast %9 : vector<1x32xf32> to vector<128x32xf32>
    %13 = arith.addf %11, %12 : vector<128x32xf32>
    %cst_8 = arith.constant 0.000000e+00 : f32
    %14 = vector.broadcast %cst_8 : f32 to vector<128x32xf32>
    %15 = arith.maximumf %13, %14 : vector<128x32xf32>
    %c96 = arith.constant 96 : index
    %c0_9 = arith.constant 0 : index
    %16 = vector.load %arg2[%c96, %c0_9] : memref<352x128xbf16, #tpu.memory_space<vmem>>, vector<32x32xbf16>
    %c8 = arith.constant 8 : index
    %c0_10 = arith.constant 0 : index
    %17 = vector.load %arg3[%c8, %c0_10] : memref<72x128xf32, #tpu.memory_space<vmem>>, vector<1x32xf32>
    %18 = arith.truncf %15 : vector<128x32xf32> to vector<128x32xbf16>
    %cst_11 = arith.constant dense<0.000000e+00> : vector<128x32xf32>
    %19 = tpu.matmul %18, %16, %cst_11 {dimension_numbers = #tpu.dot_dimension_numbers<[1], [0], [0], [1], [0, 0, 1, 1], [], []>} : vector<128x32xbf16>, vector<32x32xbf16>, vector<128x32xf32> -> vector<128x32xf32>
    %20 = vector.broadcast %17 : vector<1x32xf32> to vector<128x32xf32>
    %21 = arith.addf %19, %20 : vector<128x32xf32>
    %cst_12 = arith.constant 0.000000e+00 : f32
    %22 = vector.broadcast %cst_12 : f32 to vector<128x32xf32>
    %23 = arith.maximumf %21, %22 : vector<128x32xf32>
    %c128 = arith.constant 128 : index
    %c0_13 = arith.constant 0 : index
    %24 = vector.load %arg2[%c128, %c0_13] : memref<352x128xbf16, #tpu.memory_space<vmem>>, vector<32x128xbf16>
    %c16 = arith.constant 16 : index
    %c0_14 = arith.constant 0 : index
    %25 = vector.load %arg3[%c16, %c0_14] : memref<72x128xf32, #tpu.memory_space<vmem>>, vector<1x128xf32>
    %26 = arith.truncf %23 : vector<128x32xf32> to vector<128x32xbf16>
    %cst_15 = arith.constant dense<0.000000e+00> : vector<128x128xf32>
    %27 = tpu.matmul %26, %24, %cst_15 {dimension_numbers = #tpu.dot_dimension_numbers<[1], [0], [0], [1], [0, 0, 1, 1], [], []>} : vector<128x32xbf16>, vector<32x128xbf16>, vector<128x128xf32> -> vector<128x128xf32>
    %28 = vector.broadcast %25 : vector<1x128xf32> to vector<128x128xf32>
    %29 = arith.addf %27, %28 : vector<128x128xf32>
    %30 = arith.addf %4, %29 : vector<128x128xf32>
    %31 = arith.subf %3, %29 : vector<128x128xf32>
    %32 = vector.extract_strided_slice %31 {offsets = [0, 0], sizes = [128, 32], strides = [1, 1]} : vector<128x128xf32> to vector<128x32xf32>
    %33 = vector.extract_strided_slice %31 {offsets = [0, 64], sizes = [128, 32], strides = [1, 1]} : vector<128x128xf32> to vector<128x32xf32>
    %34 = arith.maximumf %32, %33 : vector<128x32xf32>
    %c160 = arith.constant 160 : index
    %c0_16 = arith.constant 0 : index
    %35 = vector.load %arg2[%c160, %c0_16] : memref<352x128xbf16, #tpu.memory_space<vmem>>, vector<32x32xbf16>
    %c24 = arith.constant 24 : index
    %c0_17 = arith.constant 0 : index
    %36 = vector.load %arg3[%c24, %c0_17] : memref<72x128xf32, #tpu.memory_space<vmem>>, vector<1x32xf32>
    %37 = arith.truncf %34 : vector<128x32xf32> to vector<128x32xbf16>
    %cst_18 = arith.constant dense<0.000000e+00> : vector<128x32xf32>
    %38 = tpu.matmul %37, %35, %cst_18 {dimension_numbers = #tpu.dot_dimension_numbers<[1], [0], [0], [1], [0, 0, 1, 1], [], []>} : vector<128x32xbf16>, vector<32x32xbf16>, vector<128x32xf32> -> vector<128x32xf32>
    %39 = vector.broadcast %36 : vector<1x32xf32> to vector<128x32xf32>
    %40 = arith.addf %38, %39 : vector<128x32xf32>
    %cst_19 = arith.constant 0.000000e+00 : f32
    %41 = vector.broadcast %cst_19 : f32 to vector<128x32xf32>
    %42 = arith.maximumf %40, %41 : vector<128x32xf32>
    %c192 = arith.constant 192 : index
    %c0_20 = arith.constant 0 : index
    %43 = vector.load %arg2[%c192, %c0_20] : memref<352x128xbf16, #tpu.memory_space<vmem>>, vector<32x32xbf16>
    %c32 = arith.constant 32 : index
    %c0_21 = arith.constant 0 : index
    %44 = vector.load %arg3[%c32, %c0_21] : memref<72x128xf32, #tpu.memory_space<vmem>>, vector<1x32xf32>
    %45 = arith.truncf %42 : vector<128x32xf32> to vector<128x32xbf16>
    %cst_22 = arith.constant dense<0.000000e+00> : vector<128x32xf32>
    %46 = tpu.matmul %45, %43, %cst_22 {dimension_numbers = #tpu.dot_dimension_numbers<[1], [0], [0], [1], [0, 0, 1, 1], [], []>} : vector<128x32xbf16>, vector<32x32xbf16>, vector<128x32xf32> -> vector<128x32xf32>
    %47 = vector.broadcast %44 : vector<1x32xf32> to vector<128x32xf32>
    %48 = arith.addf %46, %47 : vector<128x32xf32>
    %cst_23 = arith.constant 0.000000e+00 : f32
    %49 = vector.broadcast %cst_23 : f32 to vector<128x32xf32>
    %50 = arith.maximumf %48, %49 : vector<128x32xf32>
    %c224 = arith.constant 224 : index
    %c0_24 = arith.constant 0 : index
    %51 = vector.load %arg2[%c224, %c0_24] : memref<352x128xbf16, #tpu.memory_space<vmem>>, vector<32x128xbf16>
    %c40 = arith.constant 40 : index
    %c0_25 = arith.constant 0 : index
    %52 = vector.load %arg3[%c40, %c0_25] : memref<72x128xf32, #tpu.memory_space<vmem>>, vector<1x128xf32>
    %53 = arith.truncf %50 : vector<128x32xf32> to vector<128x32xbf16>
    %cst_26 = arith.constant dense<0.000000e+00> : vector<128x128xf32>
    %54 = tpu.matmul %53, %51, %cst_26 {dimension_numbers = #tpu.dot_dimension_numbers<[1], [0], [0], [1], [0, 0, 1, 1], [], []>} : vector<128x32xbf16>, vector<32x128xbf16>, vector<128x128xf32> -> vector<128x128xf32>
    %55 = vector.broadcast %52 : vector<1x128xf32> to vector<128x128xf32>
    %56 = arith.addf %54, %55 : vector<128x128xf32>
    %57 = arith.addf %30, %56 : vector<128x128xf32>
    %58 = arith.subf %31, %56 : vector<128x128xf32>
    %59 = vector.extract_strided_slice %58 {offsets = [0, 0], sizes = [128, 32], strides = [1, 1]} : vector<128x128xf32> to vector<128x32xf32>
    %60 = vector.extract_strided_slice %58 {offsets = [0, 64], sizes = [128, 32], strides = [1, 1]} : vector<128x128xf32> to vector<128x32xf32>
    %61 = arith.maximumf %59, %60 : vector<128x32xf32>
    %c256 = arith.constant 256 : index
    %c0_27 = arith.constant 0 : index
    %62 = vector.load %arg2[%c256, %c0_27] : memref<352x128xbf16, #tpu.memory_space<vmem>>, vector<32x32xbf16>
    %c48 = arith.constant 48 : index
    %c0_28 = arith.constant 0 : index
    %63 = vector.load %arg3[%c48, %c0_28] : memref<72x128xf32, #tpu.memory_space<vmem>>, vector<1x32xf32>
    %64 = arith.truncf %61 : vector<128x32xf32> to vector<128x32xbf16>
    %cst_29 = arith.constant dense<0.000000e+00> : vector<128x32xf32>
    %65 = tpu.matmul %64, %62, %cst_29 {dimension_numbers = #tpu.dot_dimension_numbers<[1], [0], [0], [1], [0, 0, 1, 1], [], []>} : vector<128x32xbf16>, vector<32x32xbf16>, vector<128x32xf32> -> vector<128x32xf32>
    %66 = vector.broadcast %63 : vector<1x32xf32> to vector<128x32xf32>
    %67 = arith.addf %65, %66 : vector<128x32xf32>
    %cst_30 = arith.constant 0.000000e+00 : f32
    %68 = vector.broadcast %cst_30 : f32 to vector<128x32xf32>
    %69 = arith.maximumf %67, %68 : vector<128x32xf32>
    %c288 = arith.constant 288 : index
    %c0_31 = arith.constant 0 : index
    %70 = vector.load %arg2[%c288, %c0_31] : memref<352x128xbf16, #tpu.memory_space<vmem>>, vector<32x32xbf16>
    %c56 = arith.constant 56 : index
    %c0_32 = arith.constant 0 : index
    %71 = vector.load %arg3[%c56, %c0_32] : memref<72x128xf32, #tpu.memory_space<vmem>>, vector<1x32xf32>
    %72 = arith.truncf %69 : vector<128x32xf32> to vector<128x32xbf16>
    %cst_33 = arith.constant dense<0.000000e+00> : vector<128x32xf32>
    %73 = tpu.matmul %72, %70, %cst_33 {dimension_numbers = #tpu.dot_dimension_numbers<[1], [0], [0], [1], [0, 0, 1, 1], [], []>} : vector<128x32xbf16>, vector<32x32xbf16>, vector<128x32xf32> -> vector<128x32xf32>
    %74 = vector.broadcast %71 : vector<1x32xf32> to vector<128x32xf32>
    %75 = arith.addf %73, %74 : vector<128x32xf32>
    %cst_34 = arith.constant 0.000000e+00 : f32
    %76 = vector.broadcast %cst_34 : f32 to vector<128x32xf32>
    %77 = arith.maximumf %75, %76 : vector<128x32xf32>
    %c320 = arith.constant 320 : index
    %c0_35 = arith.constant 0 : index
    %78 = vector.load %arg2[%c320, %c0_35] : memref<352x128xbf16, #tpu.memory_space<vmem>>, vector<32x128xbf16>
    %c64_36 = arith.constant 64 : index
    %c0_37 = arith.constant 0 : index
    %79 = vector.load %arg3[%c64_36, %c0_37] : memref<72x128xf32, #tpu.memory_space<vmem>>, vector<1x128xf32>
    %80 = arith.truncf %77 : vector<128x32xf32> to vector<128x32xbf16>
    %cst_38 = arith.constant dense<0.000000e+00> : vector<128x128xf32>
    %81 = tpu.matmul %80, %78, %cst_38 {dimension_numbers = #tpu.dot_dimension_numbers<[1], [0], [0], [1], [0, 0, 1, 1], [], []>} : vector<128x32xbf16>, vector<32x128xbf16>, vector<128x128xf32> -> vector<128x128xf32>
    %82 = vector.broadcast %79 : vector<1x128xf32> to vector<128x128xf32>
    %83 = arith.addf %81, %82 : vector<128x128xf32>
    %84 = arith.addf %57, %83 : vector<128x128xf32>
    %c0_39 = arith.constant 0 : index
    %c0_40 = arith.constant 0 : index
    %85 = vector.load %arg4[%c0_39, %c0_40] : memref<128x128xf32, #tpu.memory_space<vmem>>, vector<128x128xf32>
    tpu.vector_store %arg4[%c0_39, %c0_40], %84 {strides = array<i32>} : memref<128x128xf32, #tpu.memory_space<vmem>>, vector<128x128xf32>,
    return
  }
  func.func @transform_0(%arg0: i32) -> (i32, i32) {
    %c0_i32 = arith.constant 0 : i32
    %c0_i32_0 = arith.constant 0 : i32
    return %arg0, %c0_i32 : i32, i32
  }
  func.func @transform_1(%arg0: i32) -> (i32, i32) {
    %c0_i32 = arith.constant 0 : i32
    %c0_i32_0 = arith.constant 0 : i32
    %c0_i32_1 = arith.constant 0 : i32
    return %c0_i32, %c0_i32_0 : i32, i32
  }
  func.func @transform_2(%arg0: i32) -> (i32, i32) {
    %c0_i32 = arith.constant 0 : i32
    %c0_i32_0 = arith.constant 0 : i32
    %c0_i32_1 = arith.constant 0 : i32
    return %c0_i32, %c0_i32_0 : i32, i32
  }
  func.func @transform_3(%arg0: i32) -> (i32, i32) {
    %c0_i32 = arith.constant 0 : i32
    %c0_i32_0 = arith.constant 0 : i32
    return %arg0, %c0_i32 : i32, i32
  }
}

</mosaic_0001>

<llo_original>
// kernel: nhits_forward.1
$region0: #{nhits_forward.1}
  #allocation0 [shape = 'u32[]', space=smem, size = 0x4, offset = 0x4, fixed_abs, tag = 'smem constant byte address 0x4 - core index']
  #allocation1 [shape = 'u32[144,128]{1,0:T(1,128)}', space=vmem, size = 0x12000, scoped, tag = 'internal scratch']
  %s0 = inlined_call_operand.vmem [shape: f32[256,64], index: 0, kind: input, shape index: {}]
  %s1 = inlined_call_operand.vmem [shape: bf16[352,128], index: 1, kind: input, shape index: {}]
  %s2 = inlined_call_operand.vmem [shape: f32[72,128], index: 2, kind: input, shape index: {}]
  %s3 = inlined_call_operand.vmem [shape: f32[256,128], index: 3, kind: output, shape index: {}]
  %s4 = sld [smem:[#allocation0]]
  $region45: #{nhits_forward.1} parent=0
    _
  %s6 = ssub.s32 1, %s4
  %s7 = scalar_select 0, %s6, %s4
  loop: start=0, step=1, limit=4
  $region2: #{nhits_forward.1} parent=0 // loop_pre_header
    _
  $region3: #{nhits_forward.1} parent=0 // loop_header
    %s9 = sphi 0, %s13
    %p10 = scmp.ge.s32.totalorder %s9, 4
    %s19 = sphi 0, %s21
    %s22 = sphi 0, %s19
    %s23 = sphi 0, %s22
    %s39 = sphi 0, %s23
    %s43 = sphi 0, %s43
    %s45 = sphi 0, %s43
    %s46 = sphi 0, %s45
    %s60 = sphi 0, %s46
    %s64 = sphi 0, %s64
    %s66 = sphi 0, %s64
    %s67 = sphi 0, %s66
    %s81 = sphi 0, %s67
    %s87 = sphi 0, %s89
    %s90 = sphi 0, %s87
    %s91 = sphi 0, %s90
    %s107 = sphi 0, %s91
  $region4: #{nhits_forward.1} parent=0 // loop_header_branch
    %12 = sbr.rel (%p10) target = $region8
  $region5: #{nhits_forward.1} parent=0 // loop_body
    %s14 = ssub.s32 %s9, 1
    %s15 = ssub.s32 %s9, 2
    %s16 = sadd.s32 %s9, 1
    %s17 = ssub.s32 %s9, %s16
    %p18 = scmp.eq.s32.totalorder %s17, 0
    %s20 = sadd.s32 %s19, 1
    %s21 = scalar_select %p18, %s19, %s20
    %p24 = pneg %p18
    %p25 = scmp.eq.s32.totalorder %s9, 1
    %p26 = por %p24, %p25
    %p27 = scmp.ne.s32.totalorder %s19, %s22
    %p28 = scmp.eq.s32.totalorder %s9, 0
    %p29 = por %p27, %p28
    %p30 = scmp.ne.s32.totalorder %s19, %s22
    %p31 = scmp.eq.s32.totalorder %s14, 1
    %p32 = por %p30, %p31
    %p33 = scmp.ne.s32.totalorder %s22, %s23
    %p34 = scmp.eq.s32.totalorder %s14, 0
    %p35 = por %p33, %p34
    %p36 = scmp.ne.s32.totalorder %s22, %s23
    %p37 = scmp.eq.s32.totalorder %s15, 1
    %p38 = por %p36, %p37
    %p40 = scmp.ne.s32.totalorder %s23, %s39
    %p41 = scmp.eq.s32.totalorder %s15, 0
    %p42 = por %p40, %p41
    %s44 = sadd.s32 %s43, 1
    %p47 = scmp.eq.s32.totalorder %s9, 1
    %p48 = scmp.ne.s32.totalorder %s43, %s45
    %p49 = scmp.eq.s32.totalorder %s9, 0
    %p50 = por %p48, %p49
    %p51 = scmp.ne.s32.totalorder %s43, %s45
    %p52 = scmp.eq.s32.totalorder %s14, 1
    %p53 = por %p51, %p52
    %p54 = scmp.ne.s32.totalorder %s45, %s46
    %p55 = scmp.eq.s32.totalorder %s14, 0
    %p56 = por %p54, %p55
    %p57 = scmp.ne.s32.totalorder %s45, %s46
    %p58 = scmp.eq.s32.totalorder %s15, 1
    %p59 = por %p57, %p58
    %p61 = scmp.ne.s32.totalorder %s46, %s60
    %p62 = scmp.eq.s32.totalorder %s15, 0
    %p63 = por %p61, %p62
    %s65 = sadd.s32 %s64, 1
    %p68 = scmp.eq.s32.totalorder %s9, 1
    %p69 = scmp.ne.s32.totalorder %s64, %s66
    %p70 = scmp.eq.s32.totalorder %s9, 0
    %p71 = por %p69, %p70
    %p72 = scmp.ne.s32.totalorder %s64, %s66
    %p73 = scmp.eq.s32.totalorder %s14, 1
    %p74 = por %p72, %p73
    %p75 = scmp.ne.s32.totalorder %s66, %s67
    %p76 = scmp.eq.s32.totalorder %s14, 0
    %p77 = por %p75, %p76
    %p78 = scmp.ne.s32.totalorder %s66, %s67
    %p79 = scmp.eq.s32.totalorder %s15, 1
    %p80 = por %p78, %p79
    %p82 = scmp.ne.s32.totalorder %s67, %s81
    %p83 = scmp.eq.s32.totalorder %s15, 0
    %p84 = por %p82, %p83
    %s85 = ssub.s32 %s9, %s16
    %p86 = scmp.eq.s32.totalorder %s85, 0
    %s88 = sadd.s32 %s87, 1
    %s89 = scalar_select %p86, %s87, %s88
    %p92 = pneg %p86
    %p93 = scmp.eq.s32.totalorder %s9, 1
    %p94 = por %p92, %p93
    %p95 = scmp.ne.s32.totalorder %s87, %s90
    %p96 = scmp.eq.s32.totalorder %s9, 0
    %p97 = por %p95, %p96
    %p98 = scmp.ne.s32.totalorder %s87, %s90
    %p99 = scmp.eq.s32.totalorder %s14, 1
    %p100 = por %p98, %p99
    %p101 = scmp.ne.s32.totalorder %s90, %s91
    %p102 = scmp.eq.s32.totalorder %s14, 0
    %p103 = por %p101, %p102
    %p104 = scmp.ne.s32.totalorder %s90, %s91
    %p105 = scmp.eq.s32.totalorder %s15, 1
    %p106 = por %p104, %p105
    %p108 = scmp.ne.s32.totalorder %s91, %s107
    %p109 = scmp.eq.s32.totalorder %s15, 0
    %p110 = por %p108, %p109
    %p111 = scmp.le.s32.totalorder 1, %s9
    %p112 = scmp.lt.s32.totalorder %s9, 3
    %p113 = pnand %p111, %p112
    %p114 = pneg %p113
    // Predicated region
    $region9: #{nhits_forward.1} parent=5 // pred_check
      _
    $region10: #{nhits_forward.1} parent=5 // pred_check_branch
      %116 = sbr.rel (%p113) target = $region12
    $region11: #{nhits_forward.1} parent=5 // pred_region
      %s117 = ssub.s32 %s9, 1
      // Predicated region
      $region13: #{nhits_forward.1} parent=11 // pred_check
        %p118 = pneg %p56
      $region14: #{nhits_forward.1} parent=11 // pred_check_branch
        %120 = sbr.rel (%p118) target = $region16
      $region15: #{nhits_forward.1} parent=11 // pred_region
        _
      $region16: #{nhits_forward.1} parent=11 // pred_fallthru
        _
      // Predicated region
      $region17: #{nhits_forward.1} parent=11 // pred_check
        %p121 = pneg %p77
      $region18: #{nhits_forward.1} parent=11 // pred_check_branch
        %123 = sbr.rel (%p121) target = $region20
      $region19: #{nhits_forward.1} parent=11 // pred_region
        _
      $region20: #{nhits_forward.1} parent=11 // pred_fallthru
        _
    $region12: #{nhits_forward.1} parent=5 // pred_fallthru
      _
    %p124 = scmp.lt.s32.totalorder %s9, 2
    // Predicated region
    $region21: #{nhits_forward.1} parent=5 // pred_check
      %p125 = pneg %p124
    $region22: #{nhits_forward.1} parent=5 // pred_check_branch
      %127 = sbr.rel (%p125) target = $region24
    $region23: #{nhits_forward.1} parent=5 // pred_region
      // Predicated region
      $region25: #{nhits_forward.1} parent=23 // pred_check
        %p128 = pneg %p29
      $region26: #{nhits_forward.1} parent=23 // pred_check_branch
        %130 = sbr.rel (%p128) target = $region28
      $region27: #{nhits_forward.1} parent=23 // pred_region
        %s131 = smul.u32 16, %s9
        %p132 = scmp.lt.s32.totalorder %s131, 31
        %s133 = scalar_select %p132, %s131, 31
        %s134 = smul.addr %s133, 8
        %s135 = scalar_lea.vmem %s0, %s134
        %s136 = smul.u32 16, %s9
      $region28: #{nhits_forward.1} parent=23 // pred_fallthru
        _
    $region24: #{nhits_forward.1} parent=5 // pred_fallthru
      _
    %p137 = scmp.le.s32.totalorder 1, %s9
    %p138 = scmp.lt.s32.totalorder %s9, 3
    %p139 = pnand %p137, %p138
    %p140 = pneg %p139
    // Predicated region
    $region29: #{nhits_forward.1} parent=5 // pred_check
      _
    $region30: #{nhits_forward.1} parent=5 // pred_check_branch
      %142 = sbr.rel (%p139) target = $region32
    $region31: #{nhits_forward.1} parent=5 // pred_region
      %s143 = ssub.s32 %s9, 1
      %s144 = smul.u32 16, %s14
      %p145 = scmp.lt.s32.totalorder %s144, 31
      %s146 = scalar_select %p145, %s144, 31
      %s147 = smul.addr %s146, 8
      %s148 = scalar_lea.vmem %s0, %s147
      %p149 = pneg %p35
      %p150 = pneg %p32
      %p151 = pneg %p56
      %p152 = pneg %p53
      %p153 = pneg %p77
      %p154 = pneg %p74
      %p155 = pneg %p103
      %p156 = pneg %p100
      %s157 = smul.u32 16, %s14
      %p158 = scmp.lt.s32.totalorder %s157, 31
      %s159 = scalar_select %p158, %s157, 31
      %s160 = smul.addr %s159, 8
      %s161 = scalar_lea.vmem %s3, %s160
      %s162 = smul.u32 16, %s14
      %p163 = scmp.lt.s32.totalorder %s162, 31
      %s164 = scalar_select %p163, %s162, 31
      %s165 = smul.addr %s164, 8
      %s166 = scalar_lea.vmem %s0, %s165
      %s167 = smul.u32 16, %s14
      %s168 = smul.u32 16, %s14
      %p169 = scmp.lt.s32.totalorder %s168, 31
      %s170 = scalar_select %p169, %s168, 31
      %s171 = smul.addr %s170, 8
      %s172 = scalar_lea.vmem %s3, %s171
      %s173 = smul.u32 16, %s14
      %v175 = vld [vmem:[%s166] sm:$0xff]
      %v176 = vld [vmem:[%s166 + $0x8] sm:$0xff]
      %v177 = vld [vmem:[%s166 + $0x10] sm:$0xff]
      %v178 = vld [vmem:[%s166 + $0x18] sm:$0xff]
      %v179 = vld [vmem:[%s166 + $0x20] sm:$0xff]
      %v180 = vld [vmem:[%s166 + $0x28] sm:$0xff]
      %v181 = vld [vmem:[%s166 + $0x30] sm:$0xff]
      %v182 = vld [vmem:[%s166 + $0x38] sm:$0xff]
      %v183 = vld [vmem:[%s166 + $0x40] sm:$0xff]
      %v184 = vld [vmem:[%s166 + $0x48] sm:$0xff]
      %v185 = vld [vmem:[%s166 + $0x50] sm:$0xff]
      %v186 = vld [vmem:[%s166 + $0x58] sm:$0xff]
      %v187 = vld [vmem:[%s166 + $0x60] sm:$0xff]
      %v188 = vld [vmem:[%s166 + $0x68] sm:$0xff]
      %v189 = vld [vmem:[%s166 + $0x70] sm:$0xff]
      %v190 = vld [vmem:[%s166 + $0x78] sm:$0xff]
      %v191 = vld [vmem:[%s1] sm:$0xf]
      %v192 = vld [vmem:[%s1 + $0x4] sm:$0xf]
      %v193 = vld [vmem:[%s1 + $0x8] sm:$0xf]
      %v194 = vld [vmem:[%s1 + $0xc] sm:$0xf]
      %v195 = vld [vmem:[%s1 + $0x10] sm:$0xf]
      %v196 = vld [vmem:[%s1 + $0x14] sm:$0xf]
      %v197 = vld [vmem:[%s1 + $0x18] sm:$0xf]
      %v198 = vld [vmem:[%s1 + $0x1c] sm:$0xf]
      %v199 = vpack.c.bf16 %v176, %v175
      %v200 = vpack.c.bf16 %v178, %v177
      %v201 = vpack.c.bf16 %v180, %v179
      %v202 = vpack.c.bf16 %v182, %v181
      %v203 = vpack.c.bf16 %v184, %v183
      %v204 = vpack.c.bf16 %v186, %v185
      %v205 = vpack.c.bf16 %v188, %v187
      %v206 = vpack.c.bf16 %v190, %v189
      %v215 = vunpack.c.l.b16 %v191
      %v216 = vunpack.c.l.b16 %v192
      %v217 = vunpack.c.l.b16 %v193
      %v218 = vunpack.c.l.b16 %v194
      %v219 = vunpack.c.l.b16 %v195
      %v220 = vunpack.c.l.b16 %v196
      %v221 = vunpack.c.l.b16 %v197
      %v222 = vunpack.c.l.b16 %v198
      %v223 = vpack.c.b16 %v216, %v215
      %v224 = vpack.c.b16 %v218, %v217
      %v225 = vpack.c.b16 %v220, %v219
      %v226 = vpack.c.b16 %v222, %v221
      %vm231 = vcmask 523264
      %v233 = vsel %vm231, %v199, 0
      %v236 = vsel %vm231, %v200, 0
      %v239 = vsel %vm231, %v201, 0
      %v242 = vsel %vm231, %v202, 0
      %v245 = vsel %vm231, %v203, 0
      %v248 = vsel %vm231, %v204, 0
      %v251 = vsel %vm231, %v205, 0
      %v254 = vsel %vm231, %v206, 0
      %256 = vmatprep.subr.bf16.mxu0 0
      %257 = vmatpush1.bf16.msra.mxu0 0
      %258 = vmatprep.subr.bf16.mxu0 0
      %259 = vmatpush1.bf16.msra.mxu0 0
      %260 = vmatprep.subr.bf16.mxu0 0
      %261 = vmatpush1.bf16.msra.mxu0 0
      %262 = vmatprep.subr.bf16.mxu0 0
      %263 = vmatpush1.bf16.msra.mxu0 0
      %264 = vmatprep.subr.bf16.mxu0 0
      %265 = vmatpush1.bf16.msra.mxu0 %v226
      %266 = vmatprep.subr.bf16.mxu0 0
      %267 = vmatpush1.bf16.msra.mxu0 %v225
      %268 = vmatprep.subr.bf16.mxu0 0
      %269 = vmatpush1.bf16.msra.mxu0 %v224
      %270 = vmatprep.subr.bf16.mxu0 0
      %271 = vmatpush1.bf16.msra.mxu0 %v223
      %272 = vmatprep.subr.bf16.mxu0 0
      %273 = vmatpush2.bf16.msra.mxu0 0
      %274 = vmatprep.subr.bf16.mxu0 0
      %275 = vmatpush2.bf16.msra.mxu0 0
      %276 = vmatprep.subr.bf16.mxu0 0
      %277 = vmatpush2.bf16.msra.mxu0 0
      %278 = vmatprep.subr.bf16.mxu0 0
      %279 = vmatpush2.bf16.msra.mxu0 0
      %280 = vmatprep.subr.bf16.mxu0 0
      %281 = vmatpush2.bf16.msra.mxu0 0
      %282 = vmatprep.subr.bf16.mxu0 0
      %283 = vmatpush2.bf16.msra.mxu0 0
      %284 = vmatprep.subr.bf16.mxu0 0
      %285 = vmatpush2.bf16.msra.mxu0 0
      %286 = vmatprep.subr.bf16.mxu0 0
      %287 = vmatpush2.bf16.msra.mxu0 0
      %288 = vmatprep.mubr.bf16.mxu0 0
      %289 = vmatmul.mubr.bf16.gmra.mxu0 %v233
      %v290 = vpop.f32.mrf.mxu0
      %v291 = vadd.f32 0.0, %v290
      %v292 = vpop.f32.mrf.mxu0
      %v293 = vpop.f32.mrf.mxu0
      %v294 = vadd.f32 0.0, %v293
      %v295 = vpop.f32.mrf.mxu0
      %296 = vmatprep.mubr.bf16.mxu0 0
      %297 = vmatmul.mubr.bf16.gmra.mxu0 %v236
      %v298 = vpop.f32.mrf.mxu0
      %v299 = vadd.f32 0.0, %v298
      %v300 = vpop.f32.mrf.mxu0
      %v301 = vpop.f32.mrf.mxu0
      %v302 = vadd.f32 0.0, %v301
      %v303 = vpop.f32.mrf.mxu0
      %304 = vmatprep.mubr.bf16.mxu0 0
      %305 = vmatmul.mubr.bf16.gmra.mxu0 %v239
      %v306 = vpop.f32.mrf.mxu0
      %v307 = vadd.f32 0.0, %v306
      %v308 = vpop.f32.mrf.mxu0
      %v309 = vpop.f32.mrf.mxu0
      %v310 = vadd.f32 0.0, %v309
      %v311 = vpop.f32.mrf.mxu0
      %312 = vmatprep.mubr.bf16.mxu0 0
      %313 = vmatmul.mubr.bf16.gmra.mxu0 %v242
      %v314 = vpop.f32.mrf.mxu0
      %v315 = vadd.f32 0.0, %v314
      %v316 = vpop.f32.mrf.mxu0
      %v317 = vpop.f32.mrf.mxu0
      %v318 = vadd.f32 0.0, %v317
      %v319 = vpop.f32.mrf.mxu0
      %320 = vmatprep.mubr.bf16.mxu0 0
      %321 = vmatmul.mubr.bf16.gmra.mxu0 %v245
      %v322 = vpop.f32.mrf.mxu0
      %v323 = vadd.f32 0.0, %v322
      %v324 = vpop.f32.mrf.mxu0
      %v325 = vpop.f32.mrf.mxu0
      %v326 = vadd.f32 0.0, %v325
      %v327 = vpop.f32.mrf.mxu0
      %328 = vmatprep.mubr.bf16.mxu0 0
      %329 = vmatmul.mubr.bf16.gmra.mxu0 %v248
      %v330 = vpop.f32.mrf.mxu0
      %v331 = vadd.f32 0.0, %v330
      %v332 = vpop.f32.mrf.mxu0
      %v333 = vpop.f32.mrf.mxu0
      %v334 = vadd.f32 0.0, %v333
      %v335 = vpop.f32.mrf.mxu0
      %336 = vmatprep.mubr.bf16.mxu0 0
      %337 = vmatmul.mubr.bf16.gmra.mxu0 %v251
      %v338 = vpop.f32.mrf.mxu0
      %v339 = vadd.f32 0.0, %v338
      %v340 = vpop.f32.mrf.mxu0
      %v341 = vpop.f32.mrf.mxu0
      %v342 = vadd.f32 0.0, %v341
      %v343 = vpop.f32.mrf.mxu0
      %344 = vmatprep.mubr.bf16.mxu0 0
      %345 = vmatmul.mubr.bf16.gmra.mxu0 %v254
      %v346 = vpop.f32.mrf.mxu0
      %v347 = vadd.f32 0.0, %v346
      %v348 = vpop.f32.mrf.mxu0
      %v349 = vpop.f32.mrf.mxu0
      %v350 = vadd.f32 0.0, %v349
      %v351 = vpop.f32.mrf.mxu0
      %352 = vdwg.mxu0
      %369 = vrot.lane.b32.xlu0 %v291, 64
      %v370 = vpop.permute.xlu0 %369
      %371 = vrot.lane.b32.xlu0 %v294, 64
      %v372 = vpop.permute.xlu0 %371
      %373 = vrot.lane.b32.xlu0 %v299, 64
      %v374 = vpop.permute.xlu0 %373
      %375 = vrot.lane.b32.xlu0 %v302, 64
      %v376 = vpop.permute.xlu0 %375
      %377 = vrot.lane.b32.xlu0 %v307, 64
      %v378 = vpop.permute.xlu0 %377
      %379 = vrot.lane.b32.xlu0 %v310, 64
      %v380 = vpop.permute.xlu0 %379
      %381 = vrot.lane.b32.xlu0 %v315, 64
      %v382 = vpop.permute.xlu0 %381
      %383 = vrot.lane.b32.xlu0 %v318, 64
      %v384 = vpop.permute.xlu0 %383
      %385 = vrot.lane.b32.xlu0 %v323, 64
      %v386 = vpop.permute.xlu0 %385
      %387 = vrot.lane.b32.xlu0 %v326, 64
      %v388 = vpop.permute.xlu0 %387
      %389 = vrot.lane.b32.xlu0 %v331, 64
      %v390 = vpop.permute.xlu0 %389
      %391 = vrot.lane.b32.xlu0 %v334, 64
      %v392 = vpop.permute.xlu0 %391
      %393 = vrot.lane.b32.xlu0 %v339, 64
      %v394 = vpop.permute.xlu0 %393
      %395 = vrot.lane.b32.xlu0 %v342, 64
      %v396 = vpop.permute.xlu0 %395
      %397 = vrot.lane.b32.xlu0 %v347, 64
      %v398 = vpop.permute.xlu0 %397
      %399 = vrot.lane.b32.xlu0 %v350, 64
      %v400 = vpop.permute.xlu0 %399
      %v417 = vmax.f32 %v291, %v370
      %v418 = vmax.f32 %v294, %v372
      %v419 = vmax.f32 %v299, %v374
      %v420 = vmax.f32 %v302, %v376
      %v421 = vmax.f32 %v307, %v378
      %v422 = vmax.f32 %v310, %v380
      %v423 = vmax.f32 %v315, %v382
      %v424 = vmax.f32 %v318, %v384
      %v425 = vmax.f32 %v323, %v386
      %v426 = vmax.f32 %v326, %v388
      %v427 = vmax.f32 %v331, %v390
      %v428 = vmax.f32 %v334, %v392
      %v429 = vmax.f32 %v339, %v394
      %v430 = vmax.f32 %v342, %v396
      %v431 = vmax.f32 %v347, %v398
      %v432 = vmax.f32 %v350, %v400
      %v433 = vld [vmem:[%s1 + $0x20] sm:$0xf]
      %v434 = vld [vmem:[%s1 + $0x24] sm:$0xf]
      %v435 = vld [vmem:[%s1 + $0x28] sm:$0xf]
      %v436 = vld [vmem:[%s1 + $0x2c] sm:$0xf]
      %v437 = vld [vmem:[%s2] sm:$0x1]
      %v438 = vpack.c.bf16 %v418, %v417
      %v439 = vpack.c.bf16 %v420, %v419
      %v440 = vpack.c.bf16 %v422, %v421
      %v441 = vpack.c.bf16 %v424, %v423
      %v442 = vpack.c.bf16 %v426, %v425
      %v443 = vpack.c.bf16 %v428, %v427
      %v444 = vpack.c.bf16 %v430, %v429
      %v445 = vpack.c.bf16 %v432, %v431
      %v446 = vlaneseq
      %v447 = vshrl.u32 %v446, 7
      %v448 = vsub.s32 0, %v447
      %v449 = vrot.slane %v437, %v448
      %v454 = vunpack.c.l.b16 %v433
      %v455 = vunpack.c.l.b16 %v434
      %v456 = vunpack.c.l.b16 %v435
      %v457 = vunpack.c.l.b16 %v436
      %v458 = vpack.c.b16 %v455, %v454
      %v459 = vpack.c.b16 %v457, %v456
      %vm462 = vcmask 261120
      %v464 = vsel %vm462, %v438, 0
      %v467 = vsel %vm462, %v439, 0
      %v470 = vsel %vm462, %v440, 0
      %v473 = vsel %vm462, %v441, 0
      %v476 = vsel %vm462, %v442, 0
      %v479 = vsel %vm462, %v443, 0
      %v482 = vsel %vm462, %v444, 0
      %v485 = vsel %vm462, %v445, 0
      %487 = vmatprep.subr.bf16.mxu0 0
      %488 = vmatpush1.bf16.msra.mxu0 0
      %489 = vmatprep.subr.bf16.mxu0 0
      %490 = vmatpush1.bf16.msra.mxu0 0
      %491 = vmatprep.subr.bf16.mxu0 0
      %492 = vmatpush1.bf16.msra.mxu0 0
      %493 = vmatprep.subr.bf16.mxu0 0
      %494 = vmatpush1.bf16.msra.mxu0 0
      %495 = vmatprep.subr.bf16.mxu0 0
      %496 = vmatpush1.bf16.msra.mxu0 0
      %497 = vmatprep.subr.bf16.mxu0 0
      %498 = vmatpush1.bf16.msra.mxu0 0
      %499 = vmatprep.subr.bf16.mxu0 0
      %500 = vmatpush1.bf16.msra.mxu0 %v459
      %501 = vmatprep.subr.bf16.mxu0 0
      %502 = vmatpush1.bf16.msra.mxu0 %v458
      %503 = vmatprep.subr.bf16.mxu0 0
      %504 = vmatpush2.bf16.msra.mxu0 0
      %505 = vmatprep.subr.bf16.mxu0 0
      %506 = vmatpush2.bf16.msra.mxu0 0
      %507 = vmatprep.subr.bf16.mxu0 0
      %508 = vmatpush2.bf16.msra.mxu0 0
      %509 = vmatprep.subr.bf16.mxu0 0
      %510 = vmatpush2.bf16.msra.mxu0 0
      %511 = vmatprep.subr.bf16.mxu0 0
      %512 = vmatpush2.bf16.msra.mxu0 0
      %513 = vmatprep.subr.bf16.mxu0 0
      %514 = vmatpush2.bf16.msra.mxu0 0
      %515 = vmatprep.subr.bf16.mxu0 0
      %516 = vmatpush2.bf16.msra.mxu0 0
      %517 = vmatprep.subr.bf16.mxu0 0
      %518 = vmatpush2.bf16.msra.mxu0 0
      %519 = vmatprep.mubr.bf16.mxu0 0
      %520 = vmatmul.mubr.bf16.gmra.mxu0 %v464
      %v521 = vpop.f32.mrf.mxu0
      %v522 = vadd.f32 %v449, %v521
      %v523 = vpop.f32.mrf.mxu0
      %v524 = vpop.f32.mrf.mxu0
      %v525 = vadd.f32 %v449, %v524
      %v526 = vpop.f32.mrf.mxu0
      %527 = vmatprep.mubr.bf16.mxu0 0
      %528 = vmatmul.mubr.bf16.gmra.mxu0 %v467
      %v529 = vpop.f32.mrf.mxu0
      %v530 = vadd.f32 %v449, %v529
      %v531 = vpop.f32.mrf.mxu0
      %v532 = vpop.f32.mrf.mxu0
      %v533 = vadd.f32 %v449, %v532
      %v534 = vpop.f32.mrf.mxu0
      %535 = vmatprep.mubr.bf16.mxu0 0
      %536 = vmatmul.mubr.bf16.gmra.mxu0 %v470
      %v537 = vpop.f32.mrf.mxu0
      %v538 = vadd.f32 %v449, %v537
      %v539 = vpop.f32.mrf.mxu0
      %v540 = vpop.f32.mrf.mxu0
      %v541 = vadd.f32 %v449, %v540
      %v542 = vpop.f32.mrf.mxu0
      %543 = vmatprep.mubr.bf16.mxu0 0
      %544 = vmatmul.mubr.bf16.gmra.mxu0 %v473
      %v545 = vpop.f32.mrf.mxu0
      %v546 = vadd.f32 %v449, %v545
      %v547 = vpop.f32.mrf.mxu0
      %v548 = vpop.f32.mrf.mxu0
      %v549 = vadd.f32 %v449, %v548
      %v550 = vpop.f32.mrf.mxu0
      %551 = vmatprep.mubr.bf16.mxu0 0
      %552 = vmatmul.mubr.bf16.gmra.mxu0 %v476
      %v553 = vpop.f32.mrf.mxu0
      %v554 = vadd.f32 %v449, %v553
      %v555 = vpop.f32.mrf.mxu0
      %v556 = vpop.f32.mrf.mxu0
      %v557 = vadd.f32 %v449, %v556
      %v558 = vpop.f32.mrf.mxu0
      %559 = vmatprep.mubr.bf16.mxu0 0
      %560 = vmatmul.mubr.bf16.gmra.mxu0 %v479
      %v561 = vpop.f32.mrf.mxu0
      %v562 = vadd.f32 %v449, %v561
      %v563 = vpop.f32.mrf.mxu0
      %v564 = vpop.f32.mrf.mxu0
      %v565 = vadd.f32 %v449, %v564
      %v566 = vpop.f32.mrf.mxu0
      %567 = vmatprep.mubr.bf16.mxu0 0
      %568 = vmatmul.mubr.bf16.gmra.mxu0 %v482
      %v569 = vpop.f32.mrf.mxu0
      %v570 = vadd.f32 %v449, %v569
      %v571 = vpop.f32.mrf.mxu0
      %v572 = vpop.f32.mrf.mxu0
      %v573 = vadd.f32 %v449, %v572
      %v574 = vpop.f32.mrf.mxu0
      %575 = vmatprep.mubr.bf16.mxu0 0
      %576 = vmatmul.mubr.bf16.gmra.mxu0 %v485
      %v577 = vpop.f32.mrf.mxu0
      %v578 = vadd.f32 %v449, %v577
      %v579 = vpop.f32.mrf.mxu0
      %v580 = vpop.f32.mrf.mxu0
      %v581 = vadd.f32 %v449, %v580
      %v582 = vpop.f32.mrf.mxu0
      %583 = vdwg.mxu0
      %v584 = vmax.f32 %v522, 0.0
      %v585 = vmax.f32 %v525, 0.0
      %v586 = vmax.f32 %v530, 0.0
      %v587 = vmax.f32 %v533, 0.0
      %v588 = vmax.f32 %v538, 0.0
      %v589 = vmax.f32 %v541, 0.0
      %v590 = vmax.f32 %v546, 0.0
      %v591 = vmax.f32 %v549, 0.0
      %v592 = vmax.f32 %v554, 0.0
      %v593 = vmax.f32 %v557, 0.0
      %v594 = vmax.f32 %v562, 0.0
      %v595 = vmax.f32 %v565, 0.0
      %v596 = vmax.f32 %v570, 0.0
      %v597 = vmax.f32 %v573, 0.0
      %v598 = vmax.f32 %v578, 0.0
      %v599 = vmax.f32 %v581, 0.0
      %v600 = vld [vmem:[%s1 + $0x30] sm:$0xf]
      %v601 = vld [vmem:[%s1 + $0x34] sm:$0xf]
      %v602 = vld [vmem:[%s1 + $0x38] sm:$0xf]
      %v603 = vld [vmem:[%s1 + $0x3c] sm:$0xf]
      %v604 = vld [vmem:[%s2 + $0x8] sm:$0x1]
      %v605 = vpack.c.bf16 %v585, %v584
      %v606 = vpack.c.bf16 %v587, %v586
      %v607 = vpack.c.bf16 %v589, %v588
      %v608 = vpack.c.bf16 %v591, %v590
      %v609 = vpack.c.bf16 %v593, %v592
      %v610 = vpack.c.bf16 %v595, %v594
      %v611 = vpack.c.bf16 %v597, %v596
      %v612 = vpack.c.bf16 %v599, %v598
      %v613 = vlaneseq
      %v614 = vshrl.u32 %v613, 7
      %v615 = vsub.s32 0, %v614
      %v616 = vrot.slane %v604, %v615
      %v621 = vunpack.c.l.b16 %v600
      %v622 = vunpack.c.l.b16 %v601
      %v623 = vunpack.c.l.b16 %v602
      %v624 = vunpack.c.l.b16 %v603
      %v625 = vpack.c.b16 %v622, %v621
      %v626 = vpack.c.b16 %v624, %v623
      %v630 = vsel %vm462, %v605, 0
      %v633 = vsel %vm462, %v606, 0
      %v636 = vsel %vm462, %v607, 0
      %v639 = vsel %vm462, %v608, 0
      %v642 = vsel %vm462, %v609, 0
      %v645 = vsel %vm462, %v610, 0
      %v648 = vsel %vm462, %v611, 0
      %v651 = vsel %vm462, %v612, 0
      %653 = vmatprep.subr.bf16.mxu0 0
      %654 = vmatpush1.bf16.msra.mxu0 0
      %655 = vmatprep.subr.bf16.mxu0 0
      %656 = vmatpush1.bf16.msra.mxu0 0
      %657 = vmatprep.subr.bf16.mxu0 0
      %658 = vmatpush1.bf16.msra.mxu0 0
      %659 = vmatprep.subr.bf16.mxu0 0
      %660 = vmatpush1.bf16.msra.mxu0 0
      %661 = vmatprep.subr.bf16.mxu0 0
      %662 = vmatpush1.bf16.msra.mxu0 0
      %663 = vmatprep.subr.bf16.mxu0 0
      %664 = vmatpush1.bf16.msra.mxu0 0
      %665 = vmatprep.subr.bf16.mxu0 0
      %666 = vmatpush1.bf16.msra.mxu0 %v626
      %667 = vmatprep.subr.bf16.mxu0 0
      %668 = vmatpush1.bf16.msra.mxu0 %v625
      %669 = vmatprep.subr.bf16.mxu0 0
      %670 = vmatpush2.bf16.msra.mxu0 0
      %671 = vmatprep.subr.bf16.mxu0 0
      %672 = vmatpush2.bf16.msra.mxu0 0
      %673 = vmatprep.subr.bf16.mxu0 0
      %674 = vmatpush2.bf16.msra.mxu0 0
      %675 = vmatprep.subr.bf16.mxu0 0
      %676 = vmatpush2.bf16.msra.mxu0 0
      %677 = vmatprep.subr.bf16.mxu0 0
      %678 = vmatpush2.bf16.msra.mxu0 0
      %679 = vmatprep.subr.bf16.mxu0 0
      %680 = vmatpush2.bf16.msra.mxu0 0
      %681 = vmatprep.subr.bf16.mxu0 0
      %682 = vmatpush2.bf16.msra.mxu0 0
      %683 = vmatprep.subr.bf16.mxu0 0
      %684 = vmatpush2.bf16.msra.mxu0 0
      %685 = vmatprep.mubr.bf16.mxu0 0
      %686 = vmatmul.mubr.bf16.gmra.mxu0 %v630
      %v687 = vpop.f32.mrf.mxu0
      %v688 = vadd.f32 %v616, %v687
      %v689 = vpop.f32.mrf.mxu0
      %v690 = vpop.f32.mrf.mxu0
      %v691 = vadd.f32 %v616, %v690
      %v692 = vpop.f32.mrf.mxu0
      %693 = vmatprep.mubr.bf16.mxu0 0
      %694 = vmatmul.mubr.bf16.gmra.mxu0 %v633
      %v695 = vpop.f32.mrf.mxu0
      %v696 = vadd.f32 %v616, %v695
      %v697 = vpop.f32.mrf.mxu0
      %v698 = vpop.f32.mrf.mxu0
      %v699 = vadd.f32 %v616, %v698
      %v700 = vpop.f32.mrf.mxu0
      %701 = vmatprep.mubr.bf16.mxu0 0
      %702 = vmatmul.mubr.bf16.gmra.mxu0 %v636
      %v703 = vpop.f32.mrf.mxu0
      %v704 = vadd.f32 %v616, %v703
      %v705 = vpop.f32.mrf.mxu0
      %v706 = vpop.f32.mrf.mxu0
      %v707 = vadd.f32 %v616, %v706
      %v708 = vpop.f32.mrf.mxu0
      %709 = vmatprep.mubr.bf16.mxu0 0
      %710 = vmatmul.mubr.bf16.gmra.mxu0 %v639
      %v711 = vpop.f32.mrf.mxu0
      %v712 = vadd.f32 %v616, %v711
      %v713 = vpop.f32.mrf.mxu0
      %v714 = vpop.f32.mrf.mxu0
      %v715 = vadd.f32 %v616, %v714
      %v716 = vpop.f32.mrf.mxu0
      %717 = vmatprep.mubr.bf16.mxu0 0
      %718 = vmatmul.mubr.bf16.gmra.mxu0 %v642
      %v719 = vpop.f32.mrf.mxu0
      %v720 = vadd.f32 %v616, %v719
      %v721 = vpop.f32.mrf.mxu0
      %v722 = vpop.f32.mrf.mxu0
      %v723 = vadd.f32 %v616, %v722
      %v724 = vpop.f32.mrf.mxu0
      %725 = vmatprep.mubr.bf16.mxu0 0
      %726 = vmatmul.mubr.bf16.gmra.mxu0 %v645
      %v727 = vpop.f32.mrf.mxu0
      %v728 = vadd.f32 %v616, %v727
      %v729 = vpop.f32.mrf.mxu0
      %v730 = vpop.f32.mrf.mxu0
      %v731 = vadd.f32 %v616, %v730
      %v732 = vpop.f32.mrf.mxu0
      %733 = vmatprep.mubr.bf16.mxu0 0
      %734 = vmatmul.mubr.bf16.gmra.mxu0 %v648
      %v735 = vpop.f32.mrf.mxu0
      %v736 = vadd.f32 %v616, %v735
      %v737 = vpop.f32.mrf.mxu0
      %v738 = vpop.f32.mrf.mxu0
      %v739 = vadd.f32 %v616, %v738
      %v740 = vpop.f32.mrf.mxu0
      %741 = vmatprep.mubr.bf16.mxu0 0
      %742 = vmatmul.mubr.bf16.gmra.mxu0 %v651
      %v743 = vpop.f32.mrf.mxu0
      %v744 = vadd.f32 %v616, %v743
      %v745 = vpop.f32.mrf.mxu0
      %v746 = vpop.f32.mrf.mxu0
      %v747 = vadd.f32 %v616, %v746
      %v748 = vpop.f32.mrf.mxu0
      %749 = vdwg.mxu0
      %v750 = vmax.f32 %v688, 0.0
      %v751 = vmax.f32 %v691, 0.0
      %v752 = vmax.f32 %v696, 0.0
      %v753 = vmax.f32 %v699, 0.0
      %v754 = vmax.f32 %v704, 0.0
      %v755 = vmax.f32 %v707, 0.0
      %v756 = vmax.f32 %v712, 0.0
      %v757 = vmax.f32 %v715, 0.0
      %v758 = vmax.f32 %v720, 0.0
      %v759 = vmax.f32 %v723, 0.0
      %v760 = vmax.f32 %v728, 0.0
      %v761 = vmax.f32 %v731, 0.0
      %v762 = vmax.f32 %v736, 0.0
      %v763 = vmax.f32 %v739, 0.0
      %v764 = vmax.f32 %v744, 0.0
      %v765 = vmax.f32 %v747, 0.0
      %v766 = vld [vmem:[%s1 + $0x40] sm:$0xf]
      %v767 = vld [vmem:[%s1 + $0x44] sm:$0xf]
      %v768 = vld [vmem:[%s1 + $0x48] sm:$0xf]
      %v769 = vld [vmem:[%s1 + $0x4c] sm:$0xf]
      %v770 = vld [vmem:[%s2 + $0x10] sm:$0x1]
      %v771 = vpack.c.bf16 %v751, %v750
      %v772 = vpack.c.bf16 %v753, %v752
      %v773 = vpack.c.bf16 %v755, %v754
      %v774 = vpack.c.bf16 %v757, %v756
      %v775 = vpack.c.bf16 %v759, %v758
      %v776 = vpack.c.bf16 %v761, %v760
      %v777 = vpack.c.bf16 %v763, %v762
      %v778 = vpack.c.bf16 %v765, %v764
      %v779 = vlaneseq
      %v780 = vshrl.u32 %v779, 7
      %v781 = vsub.s32 0, %v780
      %v782 = vrot.slane %v770, %v781
      %v787 = vunpack.c.l.b16 %v766
      %v788 = vunpack.c.l.b16 %v767
      %v789 = vunpack.c.l.b16 %v768
      %v790 = vunpack.c.l.b16 %v769
      %v791 = vpack.c.b16 %v788, %v787
      %v792 = vpack.c.b16 %v790, %v789
      %v796 = vsel %vm462, %v771, 0
      %v799 = vsel %vm462, %v772, 0
      %v802 = vsel %vm462, %v773, 0
      %v805 = vsel %vm462, %v774, 0
      %v808 = vsel %vm462, %v775, 0
      %v811 = vsel %vm462, %v776, 0
      %v814 = vsel %vm462, %v777, 0
      %v817 = vsel %vm462, %v778, 0
      %819 = vmatprep.subr.bf16.mxu0 0
      %820 = vmatpush1.bf16.msra.mxu0 0
      %821 = vmatprep.subr.bf16.mxu0 0
      %822 = vmatpush1.bf16.msra.mxu0 0
      %823 = vmatprep.subr.bf16.mxu0 0
      %824 = vmatpush1.bf16.msra.mxu0 0
      %825 = vmatprep.subr.bf16.mxu0 0
      %826 = vmatpush1.bf16.msra.mxu0 0
      %827 = vmatprep.subr.bf16.mxu0 0
      %828 = vmatpush1.bf16.msra.mxu0 0
      %829 = vmatprep.subr.bf16.mxu0 0
      %830 = vmatpush1.bf16.msra.mxu0 0
      %831 = vmatprep.subr.bf16.mxu0 0
      %832 = vmatpush1.bf16.msra.mxu0 %v792
      %833 = vmatprep.subr.bf16.mxu0 0
      %834 = vmatpush1.bf16.msra.mxu0 %v791
      %835 = vmatprep.subr.bf16.mxu0 0
      %836 = vmatpush2.bf16.msra.mxu0 0
      %837 = vmatprep.subr.bf16.mxu0 0
      %838 = vmatpush2.bf16.msra.mxu0 0
      %839 = vmatprep.subr.bf16.mxu0 0
      %840 = vmatpush2.bf16.msra.mxu0 0
      %841 = vmatprep.subr.bf16.mxu0 0
      %842 = vmatpush2.bf16.msra.mxu0 0
      %843 = vmatprep.subr.bf16.mxu0 0
      %844 = vmatpush2.bf16.msra.mxu0 0
      %845 = vmatprep.subr.bf16.mxu0 0
      %846 = vmatpush2.bf16.msra.mxu0 0
      %847 = vmatprep.subr.bf16.mxu0 0
      %848 = vmatpush2.bf16.msra.mxu0 0
      %849 = vmatprep.subr.bf16.mxu0 0
      %850 = vmatpush2.bf16.msra.mxu0 0
      %851 = vmatprep.mubr.bf16.mxu0 0
      %852 = vmatmul.mubr.bf16.gmra.mxu0 %v796
      %v853 = vpop.f32.mrf.mxu0
      %v854 = vadd.f32 %v782, %v853
      %v855 = vpop.f32.mrf.mxu0
      %v856 = vpop.f32.mrf.mxu0
      %v857 = vadd.f32 %v782, %v856
      %v858 = vpop.f32.mrf.mxu0
      %859 = vmatprep.mubr.bf16.mxu0 0
      %860 = vmatmul.mubr.bf16.gmra.mxu0 %v799
      %v861 = vpop.f32.mrf.mxu0
      %v862 = vadd.f32 %v782, %v861
      %v863 = vpop.f32.mrf.mxu0
      %v864 = vpop.f32.mrf.mxu0
      %v865 = vadd.f32 %v782, %v864
      %v866 = vpop.f32.mrf.mxu0
      %867 = vmatprep.mubr.bf16.mxu0 0
      %868 = vmatmul.mubr.bf16.gmra.mxu0 %v802
      %v869 = vpop.f32.mrf.mxu0
      %v870 = vadd.f32 %v782, %v869
      %v871 = vpop.f32.mrf.mxu0
      %v872 = vpop.f32.mrf.mxu0
      %v873 = vadd.f32 %v782, %v872
      %v874 = vpop.f32.mrf.mxu0
      %875 = vmatprep.mubr.bf16.mxu0 0
      %876 = vmatmul.mubr.bf16.gmra.mxu0 %v805
      %v877 = vpop.f32.mrf.mxu0
      %v878 = vadd.f32 %v782, %v877
      %v879 = vpop.f32.mrf.mxu0
      %v880 = vpop.f32.mrf.mxu0
      %v881 = vadd.f32 %v782, %v880
      %v882 = vpop.f32.mrf.mxu0
      %883 = vmatprep.mubr.bf16.mxu0 0
      %884 = vmatmul.mubr.bf16.gmra.mxu0 %v808
      %v885 = vpop.f32.mrf.mxu0
      %v886 = vadd.f32 %v782, %v885
      %v887 = vpop.f32.mrf.mxu0
      %v888 = vpop.f32.mrf.mxu0
      %v889 = vadd.f32 %v782, %v888
      %v890 = vpop.f32.mrf.mxu0
      %891 = vmatprep.mubr.bf16.mxu0 0
      %892 = vmatmul.mubr.bf16.gmra.mxu0 %v811
      %v893 = vpop.f32.mrf.mxu0
      %v894 = vadd.f32 %v782, %v893
      %v895 = vpop.f32.mrf.mxu0
      %v896 = vpop.f32.mrf.mxu0
      %v897 = vadd.f32 %v782, %v896
      %v898 = vpop.f32.mrf.mxu0
      %899 = vmatprep.mubr.bf16.mxu0 0
      %900 = vmatmul.mubr.bf16.gmra.mxu0 %v814
      %v901 = vpop.f32.mrf.mxu0
      %v902 = vadd.f32 %v782, %v901
      %v903 = vpop.f32.mrf.mxu0
      %v904 = vpop.f32.mrf.mxu0
      %v905 = vadd.f32 %v782, %v904
      %v906 = vpop.f32.mrf.mxu0
      %907 = vmatprep.mubr.bf16.mxu0 0
      %908 = vmatmul.mubr.bf16.gmra.mxu0 %v817
      %v909 = vpop.f32.mrf.mxu0
      %v910 = vadd.f32 %v782, %v909
      %v911 = vpop.f32.mrf.mxu0
      %v912 = vpop.f32.mrf.mxu0
      %v913 = vadd.f32 %v782, %v912
      %v914 = vpop.f32.mrf.mxu0
      %915 = vdwg.mxu0
      %v916 = vadd.f32 %v854, 0.0
      %v917 = vadd.f32 %v857, 0.0
      %v918 = vadd.f32 %v862, 0.0
      %v919 = vadd.f32 %v865, 0.0
      %v920 = vadd.f32 %v870, 0.0
      %v921 = vadd.f32 %v873, 0.0
      %v922 = vadd.f32 %v878, 0.0
      %v923 = vadd.f32 %v881, 0.0
      %v924 = vadd.f32 %v886, 0.0
      %v925 = vadd.f32 %v889, 0.0
      %v926 = vadd.f32 %v894, 0.0
      %v927 = vadd.f32 %v897, 0.0
      %v928 = vadd.f32 %v902, 0.0
      %v929 = vadd.f32 %v905, 0.0
      %v930 = vadd.f32 %v910, 0.0
      %v931 = vadd.f32 %v913, 0.0
      %v932 = vsub.f32 %v291, %v854
      %v933 = vsub.f32 %v294, %v857
      %v934 = vsub.f32 %v299, %v862
      %v935 = vsub.f32 %v302, %v865
      %v936 = vsub.f32 %v307, %v870
      %v937 = vsub.f32 %v310, %v873
      %v938 = vsub.f32 %v315, %v878
      %v939 = vsub.f32 %v318, %v881
      %v940 = vsub.f32 %v323, %v886
      %v941 = vsub.f32 %v326, %v889
      %v942 = vsub.f32 %v331, %v894
      %v943 = vsub.f32 %v334, %v897
      %v944 = vsub.f32 %v339, %v902
      %v945 = vsub.f32 %v342, %v905
      %v946 = vsub.f32 %v347, %v910
      %v947 = vsub.f32 %v350, %v913
      %964 = vrot.lane.b32.xlu0 %v932, 64
      %v965 = vpop.permute.xlu0 %964
      %966 = vrot.lane.b32.xlu0 %v933, 64
      %v967 = vpop.permute.xlu0 %966
      %968 = vrot.lane.b32.xlu0 %v934, 64
      %v969 = vpop.permute.xlu0 %968
      %970 = vrot.lane.b32.xlu0 %v935, 64
      %v971 = vpop.permute.xlu0 %970
      %972 = vrot.lane.b32.xlu0 %v936, 64
      %v973 = vpop.permute.xlu0 %972
      %974 = vrot.lane.b32.xlu0 %v937, 64
      %v975 = vpop.permute.xlu0 %974
      %976 = vrot.lane.b32.xlu0 %v938, 64
      %v977 = vpop.permute.xlu0 %976
      %978 = vrot.lane.b32.xlu0 %v939, 64
      %v979 = vpop.permute.xlu0 %978
      %980 = vrot.lane.b32.xlu0 %v940, 64
      %v981 = vpop.permute.xlu0 %980
      %982 = vrot.lane.b32.xlu0 %v941, 64
      %v983 = vpop.permute.xlu0 %982
      %984 = vrot.lane.b32.xlu0 %v942, 64
      %v985 = vpop.permute.xlu0 %984
      %986 = vrot.lane.b32.xlu0 %v943, 64
      %v987 = vpop.permute.xlu0 %986
      %988 = vrot.lane.b32.xlu0 %v944, 64
      %v989 = vpop.permute.xlu0 %988
      %990 = vrot.lane.b32.xlu0 %v945, 64
      %v991 = vpop.permute.xlu0 %990
      %992 = vrot.lane.b32.xlu0 %v946, 64
      %v993 = vpop.permute.xlu0 %992
      %994 = vrot.lane.b32.xlu0 %v947, 64
      %v995 = vpop.permute.xlu0 %994
      %v1012 = vmax.f32 %v932, %v965
      %v1013 = vmax.f32 %v933, %v967
      %v1014 = vmax.f32 %v934, %v969
      %v1015 = vmax.f32 %v935, %v971
      %v1016 = vmax.f32 %v936, %v973
      %v1017 = vmax.f32 %v937, %v975
      %v1018 = vmax.f32 %v938, %v977
      %v1019 = vmax.f32 %v939, %v979
      %v1020 = vmax.f32 %v940, %v981
      %v1021 = vmax.f32 %v941, %v983
      %v1022 = vmax.f32 %v942, %v985
      %v1023 = vmax.f32 %v943, %v987
      %v1024 = vmax.f32 %v944, %v989
      %v1025 = vmax.f32 %v945, %v991
      %v1026 = vmax.f32 %v946, %v993
      %v1027 = vmax.f32 %v947, %v995
      %v1028 = vld [vmem:[%s1 + $0x50] sm:$0xf]
      %v1029 = vld [vmem:[%s1 + $0x54] sm:$0xf]
      %v1030 = vld [vmem:[%s1 + $0x58] sm:$0xf]
      %v1031 = vld [vmem:[%s1 + $0x5c] sm:$0xf]
      %v1032 = vld [vmem:[%s2 + $0x18] sm:$0x1]
      %v1033 = vpack.c.bf16 %v1013, %v1012
      %v1034 = vpack.c.bf16 %v1015, %v1014
      %v1035 = vpack.c.bf16 %v1017, %v1016
      %v1036 = vpack.c.bf16 %v1019, %v1018
      %v1037 = vpack.c.bf16 %v1021, %v1020
      %v1038 = vpack.c.bf16 %v1023, %v1022
      %v1039 = vpack.c.bf16 %v1025, %v1024
      %v1040 = vpack.c.bf16 %v1027, %v1026
      %v1041 = vlaneseq
      %v1042 = vshrl.u32 %v1041, 7
      %v1043 = vsub.s32 0, %v1042
      %v1044 = vrot.slane %v1032, %v1043
      %v1049 = vunpack.c.l.b16 %v1028
      %v1050 = vunpack.c.l.b16 %v1029
      %v1051 = vunpack.c.l.b16 %v1030
      %v1052 = vunpack.c.l.b16 %v1031
      %v1053 = vpack.c.b16 %v1050, %v1049
      %v1054 = vpack.c.b16 %v1052, %v1051
      %v1058 = vsel %vm462, %v1033, 0
      %v1061 = vsel %vm462, %v1034, 0
      %v1064 = vsel %vm462, %v1035, 0
      %v1067 = vsel %vm462, %v1036, 0
      %v1070 = vsel %vm462, %v1037, 0
      %v1073 = vsel %vm462, %v1038, 0
      %v1076 = vsel %vm462, %v1039, 0
      %v1079 = vsel %vm462, %v1040, 0
      %1081 = vmatprep.subr.bf16.mxu0 0
      %1082 = vmatpush1.bf16.msra.mxu0 0
      %1083 = vmatprep.subr.bf16.mxu0 0
      %1084 = vmatpush1.bf16.msra.mxu0 0
      %1085 = vmatprep.subr.bf16.mxu0 0
      %1086 = vmatpush1.bf16.msra.mxu0 0
      %1087 = vmatprep.subr.bf16.mxu0 0
      %1088 = vmatpush1.bf16.msra.mxu0 0
      %1089 = vmatprep.subr.bf16.mxu0 0
      %1090 = vmatpush1.bf16.msra.mxu0 0
      %1091 = vmatprep.subr.bf16.mxu0 0
      %1092 = vmatpush1.bf16.msra.mxu0 0
      %1093 = vmatprep.subr.bf16.mxu0 0
      %1094 = vmatpush1.bf16.msra.mxu0 %v1054
      %1095 = vmatprep.subr.bf16.mxu0 0
      %1096 = vmatpush1.bf16.msra.mxu0 %v1053
      %1097 = vmatprep.subr.bf16.mxu0 0
      %1098 = vmatpush2.bf16.msra.mxu0 0
      %1099 = vmatprep.subr.bf16.mxu0 0
      %1100 = vmatpush2.bf16.msra.mxu0 0
      %1101 = vmatprep.subr.bf16.mxu0 0
      %1102 = vmatpush2.bf16.msra.mxu0 0
      %1103 = vmatprep.subr.bf16.mxu0 0
      %1104 = vmatpush2.bf16.msra.mxu0 0
      %1105 = vmatprep.subr.bf16.mxu0 0
      %1106 = vmatpush2.bf16.msra.mxu0 0
      %1107 = vmatprep.subr.bf16.mxu0 0
      %1108 = vmatpush2.bf16.msra.mxu0 0
      %1109 = vmatprep.subr.bf16.mxu0 0
      %1110 = vmatpush2.bf16.msra.mxu0 0
      %1111 = vmatprep.subr.bf16.mxu0 0
      %1112 = vmatpush2.bf16.msra.mxu0 0
      %1113 = vmatprep.mubr.bf16.mxu0 0
      %1114 = vmatmul.mubr.bf16.gmra.mxu0 %v1058
      %v1115 = vpop.f32.mrf.mxu0
      %v1116 = vadd.f32 %v1044, %v1115
      %v1117 = vpop.f32.mrf.mxu0
      %v1118 = vpop.f32.mrf.mxu0
      %v1119 = vadd.f32 %v1044, %v1118
      %v1120 = vpop.f32.mrf.mxu0
      %1121 = vmatprep.mubr.bf16.mxu0 0
      %1122 = vmatmul.mubr.bf16.gmra.mxu0 %v1061
      %v1123 = vpop.f32.mrf.mxu0
      %v1124 = vadd.f32 %v1044, %v1123
      %v1125 = vpop.f32.mrf.mxu0
      %v1126 = vpop.f32.mrf.mxu0
      %v1127 = vadd.f32 %v1044, %v1126
      %v1128 = vpop.f32.mrf.mxu0
      %1129 = vmatprep.mubr.bf16.mxu0 0
      %1130 = vmatmul.mubr.bf16.gmra.mxu0 %v1064
      %v1131 = vpop.f32.mrf.mxu0
      %v1132 = vadd.f32 %v1044, %v1131
      %v1133 = vpop.f32.mrf.mxu0
      %v1134 = vpop.f32.mrf.mxu0
      %v1135 = vadd.f32 %v1044, %v1134
      %v1136 = vpop.f32.mrf.mxu0
      %1137 = vmatprep.mubr.bf16.mxu0 0
      %1138 = vmatmul.mubr.bf16.gmra.mxu0 %v1067
      %v1139 = vpop.f32.mrf.mxu0
      %v1140 = vadd.f32 %v1044, %v1139
      %v1141 = vpop.f32.mrf.mxu0
      %v1142 = vpop.f32.mrf.mxu0
      %v1143 = vadd.f32 %v1044, %v1142
      %v1144 = vpop.f32.mrf.mxu0
      %1145 = vmatprep.mubr.bf16.mxu0 0
      %1146 = vmatmul.mubr.bf16.gmra.mxu0 %v1070
      %v1147 = vpop.f32.mrf.mxu0
      %v1148 = vadd.f32 %v1044, %v1147
      %v1149 = vpop.f32.mrf.mxu0
      %v1150 = vpop.f32.mrf.mxu0
      %v1151 = vadd.f32 %v1044, %v1150
      %v1152 = vpop.f32.mrf.mxu0
      %1153 = vmatprep.mubr.bf16.mxu0 0
      %1154 = vmatmul.mubr.bf16.gmra.mxu0 %v1073
      %v1155 = vpop.f32.mrf.mxu0
      %v1156 = vadd.f32 %v1044, %v1155
      %v1157 = vpop.f32.mrf.mxu0
      %v1158 = vpop.f32.mrf.mxu0
      %v1159 = vadd.f32 %v1044, %v1158
      %v1160 = vpop.f32.mrf.mxu0
      %1161 = vmatprep.mubr.bf16.mxu0 0
      %1162 = vmatmul.mubr.bf16.gmra.mxu0 %v1076
      %v1163 = vpop.f32.mrf.mxu0
      %v1164 = vadd.f32 %v1044, %v1163
      %v1165 = vpop.f32.mrf.mxu0
      %v1166 = vpop.f32.mrf.mxu0
      %v1167 = vadd.f32 %v1044, %v1166
      %v1168 = vpop.f32.mrf.mxu0
      %1169 = vmatprep.mubr.bf16.mxu0 0
      %1170 = vmatmul.mubr.bf16.gmra.mxu0 %v1079
      %v1171 = vpop.f32.mrf.mxu0
      %v1172 = vadd.f32 %v1044, %v1171
      %v1173 = vpop.f32.mrf.mxu0
      %v1174 = vpop.f32.mrf.mxu0
      %v1175 = vadd.f32 %v1044, %v1174
      %v1176 = vpop.f32.mrf.mxu0
      %1177 = vdwg.mxu0
      %v1178 = vmax.f32 %v1116, 0.0
      %v1179 = vmax.f32 %v1119, 0.0
      %v1180 = vmax.f32 %v1124, 0.0
      %v1181 = vmax.f32 %v1127, 0.0
      %v1182 = vmax.f32 %v1132, 0.0
      %v1183 = vmax.f32 %v1135, 0.0
      %v1184 = vmax.f32 %v1140, 0.0
      %v1185 = vmax.f32 %v1143, 0.0
      %v1186 = vmax.f32 %v1148, 0.0
      %v1187 = vmax.f32 %v1151, 0.0
      %v1188 = vmax.f32 %v1156, 0.0
      %v1189 = vmax.f32 %v1159, 0.0
      %v1190 = vmax.f32 %v1164, 0.0
      %v1191 = vmax.f32 %v1167, 0.0
      %v1192 = vmax.f32 %v1172, 0.0
      %v1193 = vmax.f32 %v1175, 0.0
      %v1194 = vld [vmem:[%s1 + $0x60] sm:$0xf]
      %v1195 = vld [vmem:[%s1 + $0x64] sm:$0xf]
      %v1196 = vld [vmem:[%s1 + $0x68] sm:$0xf]
      %v1197 = vld [vmem:[%s1 + $0x6c] sm:$0xf]
      %v1198 = vld [vmem:[%s2 + $0x20] sm:$0x1]
      %v1199 = vpack.c.bf16 %v1179, %v1178
      %v1200 = vpack.c.bf16 %v1181, %v1180
      %v1201 = vpack.c.bf16 %v1183, %v1182
      %v1202 = vpack.c.bf16 %v1185, %v1184
      %v1203 = vpack.c.bf16 %v1187, %v1186
      %v1204 = vpack.c.bf16 %v1189, %v1188
      %v1205 = vpack.c.bf16 %v1191, %v1190
      %v1206 = vpack.c.bf16 %v1193, %v1192
      %v1207 = vlaneseq
      %v1208 = vshrl.u32 %v1207, 7
      %v1209 = vsub.s32 0, %v1208
      %v1210 = vrot.slane %v1198, %v1209
      %v1215 = vunpack.c.l.b16 %v1194
      %v1216 = vunpack.c.l.b16 %v1195
      %v1217 = vunpack.c.l.b16 %v1196
      %v1218 = vunpack.c.l.b16 %v1197
      %v1219 = vpack.c.b16 %v1216, %v1215
      %v1220 = vpack.c.b16 %v1218, %v1217
      %v1224 = vsel %vm462, %v1199, 0
      %v1227 = vsel %vm462, %v1200, 0
      %v1230 = vsel %vm462, %v1201, 0
      %v1233 = vsel %vm462, %v1202, 0
      %v1236 = vsel %vm462, %v1203, 0
      %v1239 = vsel %vm462, %v1204, 0
      %v1242 = vsel %vm462, %v1205, 0
      %v1245 = vsel %vm462, %v1206, 0
      %1247 = vmatprep.subr.bf16.mxu0 0
      %1248 = vmatpush1.bf16.msra.mxu0 0
      %1249 = vmatprep.subr.bf16.mxu0 0
      %1250 = vmatpush1.bf16.msra.mxu0 0
      %1251 = vmatprep.subr.bf16.mxu0 0
      %1252 = vmatpush1.bf16.msra.mxu0 0
      %1253 = vmatprep.subr.bf16.mxu0 0
      %1254 = vmatpush1.bf16.msra.mxu0 0
      %1255 = vmatprep.subr.bf16.mxu0 0
      %1256 = vmatpush1.bf16.msra.mxu0 0
      %1257 = vmatprep.subr.bf16.mxu0 0
      %1258 = vmatpush1.bf16.msra.mxu0 0
      %1259 = vmatprep.subr.bf16.mxu0 0
      %1260 = vmatpush1.bf16.msra.mxu0 %v1220
      %1261 = vmatprep.subr.bf16.mxu0 0
      %1262 = vmatpush1.bf16.msra.mxu0 %v1219
      %1263 = vmatprep.subr.bf16.mxu0 0
      %1264 = vmatpush2.bf16.msra.mxu0 0
      %1265 = vmatprep.subr.bf16.mxu0 0
      %1266 = vmatpush2.bf16.msra.mxu0 0
      %1267 = vmatprep.subr.bf16.mxu0 0
      %1268 = vmatpush2.bf16.msra.mxu0 0
      %1269 = vmatprep.subr.bf16.mxu0 0
      %1270 = vmatpush2.bf16.msra.mxu0 0
      %1271 = vmatprep.subr.bf16.mxu0 0
      %1272 = vmatpush2.bf16.msra.mxu0 0
      %1273 = vmatprep.subr.bf16.mxu0 0
      %1274 = vmatpush2.bf16.msra.mxu0 0
      %1275 = vmatprep.subr.bf16.mxu0 0
      %1276 = vmatpush2.bf16.msra.mxu0 0
      %1277 = vmatprep.subr.bf16.mxu0 0
      %1278 = vmatpush2.bf16.msra.mxu0 0
      %1279 = vmatprep.mubr.bf16.mxu0 0
      %1280 = vmatmul.mubr.bf16.gmra.mxu0 %v1224
      %v1281 = vpop.f32.mrf.mxu0
      %v1282 = vadd.f32 %v1210, %v1281
      %v1283 = vpop.f32.mrf.mxu0
      %v1284 = vpop.f32.mrf.mxu0
      %v1285 = vadd.f32 %v1210, %v1284
      %v1286 = vpop.f32.mrf.mxu0
      %1287 = vmatprep.mubr.bf16.mxu0 0
      %1288 = vmatmul.mubr.bf16.gmra.mxu0 %v1227
      %v1289 = vpop.f32.mrf.mxu0
      %v1290 = vadd.f32 %v1210, %v1289
      %v1291 = vpop.f32.mrf.mxu0
      %v1292 = vpop.f32.mrf.mxu0
      %v1293 = vadd.f32 %v1210, %v1292
      %v1294 = vpop.f32.mrf.mxu0
      %1295 = vmatprep.mubr.bf16.mxu0 0
      %1296 = vmatmul.mubr.bf16.gmra.mxu0 %v1230
      %v1297 = vpop.f32.mrf.mxu0
      %v1298 = vadd.f32 %v1210, %v1297
      %v1299 = vpop.f32.mrf.mxu0
      %v1300 = vpop.f32.mrf.mxu0
      %v1301 = vadd.f32 %v1210, %v1300
      %v1302 = vpop.f32.mrf.mxu0
      %1303 = vmatprep.mubr.bf16.mxu0 0
      %1304 = vmatmul.mubr.bf16.gmra.mxu0 %v1233
      %v1305 = vpop.f32.mrf.mxu0
      %v1306 = vadd.f32 %v1210, %v1305
      %v1307 = vpop.f32.mrf.mxu0
      %v1308 = vpop.f32.mrf.mxu0
      %v1309 = vadd.f32 %v1210, %v1308
      %v1310 = vpop.f32.mrf.mxu0
      %1311 = vmatprep.mubr.bf16.mxu0 0
      %1312 = vmatmul.mubr.bf16.gmra.mxu0 %v1236
      %v1313 = vpop.f32.mrf.mxu0
      %v1314 = vadd.f32 %v1210, %v1313
      %v1315 = vpop.f32.mrf.mxu0
      %v1316 = vpop.f32.mrf.mxu0
      %v1317 = vadd.f32 %v1210, %v1316
      %v1318 = vpop.f32.mrf.mxu0
      %1319 = vmatprep.mubr.bf16.mxu0 0
      %1320 = vmatmul.mubr.bf16.gmra.mxu0 %v1239
      %v1321 = vpop.f32.mrf.mxu0
      %v1322 = vadd.f32 %v1210, %v1321
      %v1323 = vpop.f32.mrf.mxu0
      %v1324 = vpop.f32.mrf.mxu0
      %v1325 = vadd.f32 %v1210, %v1324
      %v1326 = vpop.f32.mrf.mxu0
      %1327 = vmatprep.mubr.bf16.mxu0 0
      %1328 = vmatmul.mubr.bf16.gmra.mxu0 %v1242
      %v1329 = vpop.f32.mrf.mxu0
      %v1330 = vadd.f32 %v1210, %v1329
      %v1331 = vpop.f32.mrf.mxu0
      %v1332 = vpop.f32.mrf.mxu0
      %v1333 = vadd.f32 %v1210, %v1332
      %v1334 = vpop.f32.mrf.mxu0
      %1335 = vmatprep.mubr.bf16.mxu0 0
      %1336 = vmatmul.mubr.bf16.gmra.mxu0 %v1245
      %v1337 = vpop.f32.mrf.mxu0
      %v1338 = vadd.f32 %v1210, %v1337
      %v1339 = vpop.f32.mrf.mxu0
      %v1340 = vpop.f32.mrf.mxu0
      %v1341 = vadd.f32 %v1210, %v1340
      %v1342 = vpop.f32.mrf.mxu0
      %1343 = vdwg.mxu0
      %v1344 = vmax.f32 %v1282, 0.0
      %v1345 = vmax.f32 %v1285, 0.0
      %v1346 = vmax.f32 %v1290, 0.0
      %v1347 = vmax.f32 %v1293, 0.0
      %v1348 = vmax.f32 %v1298, 0.0
      %v1349 = vmax.f32 %v1301, 0.0
      %v1350 = vmax.f32 %v1306, 0.0
      %v1351 = vmax.f32 %v1309, 0.0
      %v1352 = vmax.f32 %v1314, 0.0
      %v1353 = vmax.f32 %v1317, 0.0
      %v1354 = vmax.f32 %v1322, 0.0
      %v1355 = vmax.f32 %v1325, 0.0
      %v1356 = vmax.f32 %v1330, 0.0
      %v1357 = vmax.f32 %v1333, 0.0
      %v1358 = vmax.f32 %v1338, 0.0
      %v1359 = vmax.f32 %v1341, 0.0
      %v1360 = vld [vmem:[%s1 + $0x70] sm:$0xf]
      %v1361 = vld [vmem:[%s1 + $0x74] sm:$0xf]
      %v1362 = vld [vmem:[%s1 + $0x78] sm:$0xf]
      %v1363 = vld [vmem:[%s1 + $0x7c] sm:$0xf]
      %v1364 = vld [vmem:[%s2 + $0x28] sm:$0x1]
      %v1365 = vpack.c.bf16 %v1345, %v1344
      %v1366 = vpack.c.bf16 %v1347, %v1346
      %v1367 = vpack.c.bf16 %v1349, %v1348
      %v1368 = vpack.c.bf16 %v1351, %v1350
      %v1369 = vpack.c.bf16 %v1353, %v1352
      %v1370 = vpack.c.bf16 %v1355, %v1354
      %v1371 = vpack.c.bf16 %v1357, %v1356
      %v1372 = vpack.c.bf16 %v1359, %v1358
      %v1373 = vlaneseq
      %v1374 = vshrl.u32 %v1373, 7
      %v1375 = vsub.s32 0, %v1374
      %v1376 = vrot.slane %v1364, %v1375
      %v1381 = vunpack.c.l.b16 %v1360
      %v1382 = vunpack.c.l.b16 %v1361
      %v1383 = vunpack.c.l.b16 %v1362
      %v1384 = vunpack.c.l.b16 %v1363
      %v1385 = vpack.c.b16 %v1382, %v1381
      %v1386 = vpack.c.b16 %v1384, %v1383
      %v1390 = vsel %vm462, %v1365, 0
      %v1393 = vsel %vm462, %v1366, 0
      %v1396 = vsel %vm462, %v1367, 0
      %v1399 = vsel %vm462, %v1368, 0
      %v1402 = vsel %vm462, %v1369, 0
      %v1405 = vsel %vm462, %v1370, 0
      %v1408 = vsel %vm462, %v1371, 0
      %v1411 = vsel %vm462, %v1372, 0
      %1413 = vmatprep.subr.bf16.mxu0 0
      %1414 = vmatpush1.bf16.msra.mxu0 0
      %1415 = vmatprep.subr.bf16.mxu0 0
      %1416 = vmatpush1.bf16.msra.mxu0 0
      %1417 = vmatprep.subr.bf16.mxu0 0
      %1418 = vmatpush1.bf16.msra.mxu0 0
      %1419 = vmatprep.subr.bf16.mxu0 0
      %1420 = vmatpush1.bf16.msra.mxu0 0
      %1421 = vmatprep.subr.bf16.mxu0 0
      %1422 = vmatpush1.bf16.msra.mxu0 0
      %1423 = vmatprep.subr.bf16.mxu0 0
      %1424 = vmatpush1.bf16.msra.mxu0 0
      %1425 = vmatprep.subr.bf16.mxu0 0
      %1426 = vmatpush1.bf16.msra.mxu0 %v1386
      %1427 = vmatprep.subr.bf16.mxu0 0
      %1428 = vmatpush1.bf16.msra.mxu0 %v1385
      %1429 = vmatprep.subr.bf16.mxu0 0
      %1430 = vmatpush2.bf16.msra.mxu0 0
      %1431 = vmatprep.subr.bf16.mxu0 0
      %1432 = vmatpush2.bf16.msra.mxu0 0
      %1433 = vmatprep.subr.bf16.mxu0 0
      %1434 = vmatpush2.bf16.msra.mxu0 0
      %1435 = vmatprep.subr.bf16.mxu0 0
      %1436 = vmatpush2.bf16.msra.mxu0 0
      %1437 = vmatprep.subr.bf16.mxu0 0
      %1438 = vmatpush2.bf16.msra.mxu0 0
      %1439 = vmatprep.subr.bf16.mxu0 0
      %1440 = vmatpush2.bf16.msra.mxu0 0
      %1441 = vmatprep.subr.bf16.mxu0 0
      %1442 = vmatpush2.bf16.msra.mxu0 0
      %1443 = vmatprep.subr.bf16.mxu0 0
      %1444 = vmatpush2.bf16.msra.mxu0 0
      %1445 = vmatprep.mubr.bf16.mxu0 0
      %1446 = vmatmul.mubr.bf16.gmra.mxu0 %v1390
      %v1447 = vpop.f32.mrf.mxu0
      %v1448 = vadd.f32 %v1376, %v1447
      %v1449 = vpop.f32.mrf.mxu0
      %v1450 = vpop.f32.mrf.mxu0
      %v1451 = vadd.f32 %v1376, %v1450
      %v1452 = vpop.f32.mrf.mxu0
      %1453 = vmatprep.mubr.bf16.mxu0 0
      %1454 = vmatmul.mubr.bf16.gmra.mxu0 %v1393
      %v1455 = vpop.f32.mrf.mxu0
      %v1456 = vadd.f32 %v1376, %v1455
      %v1457 = vpop.f32.mrf.mxu0
      %v1458 = vpop.f32.mrf.mxu0
      %v1459 = vadd.f32 %v1376, %v1458
      %v1460 = vpop.f32.mrf.mxu0
      %1461 = vmatprep.mubr.bf16.mxu0 0
      %1462 = vmatmul.mubr.bf16.gmra.mxu0 %v1396
      %v1463 = vpop.f32.mrf.mxu0
      %v1464 = vadd.f32 %v1376, %v1463
      %v1465 = vpop.f32.mrf.mxu0
      %v1466 = vpop.f32.mrf.mxu0
      %v1467 = vadd.f32 %v1376, %v1466
      %v1468 = vpop.f32.mrf.mxu0
      %1469 = vmatprep.mubr.bf16.mxu0 0
      %1470 = vmatmul.mubr.bf16.gmra.mxu0 %v1399
      %v1471 = vpop.f32.mrf.mxu0
      %v1472 = vadd.f32 %v1376, %v1471
      %v1473 = vpop.f32.mrf.mxu0
      %v1474 = vpop.f32.mrf.mxu0
      %v1475 = vadd.f32 %v1376, %v1474
      %v1476 = vpop.f32.mrf.mxu0
      %1477 = vmatprep.mubr.bf16.mxu0 0
      %1478 = vmatmul.mubr.bf16.gmra.mxu0 %v1402
      %v1479 = vpop.f32.mrf.mxu0
      %v1480 = vadd.f32 %v1376, %v1479
      %v1481 = vpop.f32.mrf.mxu0
      %v1482 = vpop.f32.mrf.mxu0
      %v1483 = vadd.f32 %v1376, %v1482
      %v1484 = vpop.f32.mrf.mxu0
      %1485 = vmatprep.mubr.bf16.mxu0 0
      %1486 = vmatmul.mubr.bf16.gmra.mxu0 %v1405
      %v1487 = vpop.f32.mrf.mxu0
      %v1488 = vadd.f32 %v1376, %v1487
      %v1489 = vpop.f32.mrf.mxu0
      %v1490 = vpop.f32.mrf.mxu0
      %v1491 = vadd.f32 %v1376, %v1490
      %v1492 = vpop.f32.mrf.mxu0
      %1493 = vmatprep.mubr.bf16.mxu0 0
      %1494 = vmatmul.mubr.bf16.gmra.mxu0 %v1408
      %v1495 = vpop.f32.mrf.mxu0
      %v1496 = vadd.f32 %v1376, %v1495
      %v1497 = vpop.f32.mrf.mxu0
      %v1498 = vpop.f32.mrf.mxu0
      %v1499 = vadd.f32 %v1376, %v1498
      %v1500 = vpop.f32.mrf.mxu0
      %1501 = vmatprep.mubr.bf16.mxu0 0
      %1502 = vmatmul.mubr.bf16.gmra.mxu0 %v1411
      %v1503 = vpop.f32.mrf.mxu0
      %v1504 = vadd.f32 %v1376, %v1503
      %v1505 = vpop.f32.mrf.mxu0
      %v1506 = vpop.f32.mrf.mxu0
      %v1507 = vadd.f32 %v1376, %v1506
      %v1508 = vpop.f32.mrf.mxu0
      %1509 = vdwg.mxu0
      %v1510 = vadd.f32 %v916, %v1448
      %v1511 = vadd.f32 %v917, %v1451
      %v1512 = vadd.f32 %v918, %v1456
      %v1513 = vadd.f32 %v919, %v1459
      %v1514 = vadd.f32 %v920, %v1464
      %v1515 = vadd.f32 %v921, %v1467
      %v1516 = vadd.f32 %v922, %v1472
      %v1517 = vadd.f32 %v923, %v1475
      %v1518 = vadd.f32 %v924, %v1480
      %v1519 = vadd.f32 %v925, %v1483
      %v1520 = vadd.f32 %v926, %v1488
      %v1521 = vadd.f32 %v927, %v1491
      %v1522 = vadd.f32 %v928, %v1496
      %v1523 = vadd.f32 %v929, %v1499
      %v1524 = vadd.f32 %v930, %v1504
      %v1525 = vadd.f32 %v931, %v1507
      %v1526 = vsub.f32 %v932, %v1448
      %v1527 = vsub.f32 %v933, %v1451
      %v1528 = vsub.f32 %v934, %v1456
      %v1529 = vsub.f32 %v935, %v1459
      %v1530 = vsub.f32 %v936, %v1464
      %v1531 = vsub.f32 %v937, %v1467
      %v1532 = vsub.f32 %v938, %v1472
      %v1533 = vsub.f32 %v939, %v1475
      %v1534 = vsub.f32 %v940, %v1480
      %v1535 = vsub.f32 %v941, %v1483
      %v1536 = vsub.f32 %v942, %v1488
      %v1537 = vsub.f32 %v943, %v1491
      %v1538 = vsub.f32 %v944, %v1496
      %v1539 = vsub.f32 %v945, %v1499
      %v1540 = vsub.f32 %v946, %v1504
      %v1541 = vsub.f32 %v947, %v1507
      %1558 = vrot.lane.b32.xlu0 %v1526, 64
      %v1559 = vpop.permute.xlu0 %1558
      %1560 = vrot.lane.b32.xlu0 %v1527, 64
      %v1561 = vpop.permute.xlu0 %1560
      %1562 = vrot.lane.b32.xlu0 %v1528, 64
      %v1563 = vpop.permute.xlu0 %1562
      %1564 = vrot.lane.b32.xlu0 %v1529, 64
      %v1565 = vpop.permute.xlu0 %1564
      %1566 = vrot.lane.b32.xlu0 %v1530, 64
      %v1567 = vpop.permute.xlu0 %1566
      %1568 = vrot.lane.b32.xlu0 %v1531, 64
      %v1569 = vpop.permute.xlu0 %1568
      %1570 = vrot.lane.b32.xlu0 %v1532, 64
      %v1571 = vpop.permute.xlu0 %1570
      %1572 = vrot.lane.b32.xlu0 %v1533, 64
      %v1573 = vpop.permute.xlu0 %1572
      %1574 = vrot.lane.b32.xlu0 %v1534, 64
      %v1575 = vpop.permute.xlu0 %1574
      %1576 = vrot.lane.b32.xlu0 %v1535, 64
      %v1577 = vpop.permute.xlu0 %1576
      %1578 = vrot.lane.b32.xlu0 %v1536, 64
      %v1579 = vpop.permute.xlu0 %1578
      %1580 = vrot.lane.b32.xlu0 %v1537, 64
      %v1581 = vpop.permute.xlu0 %1580
      %1582 = vrot.lane.b32.xlu0 %v1538, 64
      %v1583 = vpop.permute.xlu0 %1582
      %1584 = vrot.lane.b32.xlu0 %v1539, 64
      %v1585 = vpop.permute.xlu0 %1584
      %1586 = vrot.lane.b32.xlu0 %v1540, 64
      %v1587 = vpop.permute.xlu0 %1586
      %1588 = vrot.lane.b32.xlu0 %v1541, 64
      %v1589 = vpop.permute.xlu0 %1588
      %v1606 = vmax.f32 %v1526, %v1559
      %v1607 = vmax.f32 %v1527, %v1561
      %v1608 = vmax.f32 %v1528, %v1563
      %v1609 = vmax.f32 %v1529, %v1565
      %v1610 = vmax.f32 %v1530, %v1567
      %v1611 = vmax.f32 %v1531, %v1569
      %v1612 = vmax.f32 %v1532, %v1571
      %v1613 = vmax.f32 %v1533, %v1573
      %v1614 = vmax.f32 %v1534, %v1575
      %v1615 = vmax.f32 %v1535, %v1577
      %v1616 = vmax.f32 %v1536, %v1579
      %v1617 = vmax.f32 %v1537, %v1581
      %v1618 = vmax.f32 %v1538, %v1583
      %v1619 = vmax.f32 %v1539, %v1585
      %v1620 = vmax.f32 %v1540, %v1587
      %v1621 = vmax.f32 %v1541, %v1589
      %v1622 = vld [vmem:[%s1 + $0x80] sm:$0xf]
      %v1623 = vld [vmem:[%s1 + $0x84] sm:$0xf]
      %v1624 = vld [vmem:[%s1 + $0x88] sm:$0xf]
      %v1625 = vld [vmem:[%s1 + $0x8c] sm:$0xf]
      %v1626 = vld [vmem:[%s2 + $0x30] sm:$0x1]
      %v1627 = vpack.c.bf16 %v1607, %v1606
      %v1628 = vpack.c.bf16 %v1609, %v1608
      %v1629 = vpack.c.bf16 %v1611, %v1610
      %v1630 = vpack.c.bf16 %v1613, %v1612
      %v1631 = vpack.c.bf16 %v1615, %v1614
      %v1632 = vpack.c.bf16 %v1617, %v1616
      %v1633 = vpack.c.bf16 %v1619, %v1618
      %v1634 = vpack.c.bf16 %v1621, %v1620
      %v1635 = vlaneseq
      %v1636 = vshrl.u32 %v1635, 7
      %v1637 = vsub.s32 0, %v1636
      %v1638 = vrot.slane %v1626, %v1637
      %v1643 = vunpack.c.l.b16 %v1622
      %v1644 = vunpack.c.l.b16 %v1623
      %v1645 = vunpack.c.l.b16 %v1624
      %v1646 = vunpack.c.l.b16 %v1625
      %v1647 = vpack.c.b16 %v1644, %v1643
      %v1648 = vpack.c.b16 %v1646, %v1645
      %v1652 = vsel %vm462, %v1627, 0
      %v1655 = vsel %vm462, %v1628, 0
      %v1658 = vsel %vm462, %v1629, 0
      %v1661 = vsel %vm462, %v1630, 0
      %v1664 = vsel %vm462, %v1631, 0
      %v1667 = vsel %vm462, %v1632, 0
      %v1670 = vsel %vm462, %v1633, 0
      %v1673 = vsel %vm462, %v1634, 0
      %1675 = vmatprep.subr.bf16.mxu0 0
      %1676 = vmatpush1.bf16.msra.mxu0 0
      %1677 = vmatprep.subr.bf16.mxu0 0
      %1678 = vmatpush1.bf16.msra.mxu0 0
      %1679 = vmatprep.subr.bf16.mxu0 0
      %1680 = vmatpush1.bf16.msra.mxu0 0
      %1681 = vmatprep.subr.bf16.mxu0 0
      %1682 = vmatpush1.bf16.msra.mxu0 0
      %1683 = vmatprep.subr.bf16.mxu0 0
      %1684 = vmatpush1.bf16.msra.mxu0 0
      %1685 = vmatprep.subr.bf16.mxu0 0
      %1686 = vmatpush1.bf16.msra.mxu0 0
      %1687 = vmatprep.subr.bf16.mxu0 0
      %1688 = vmatpush1.bf16.msra.mxu0 %v1648
      %1689 = vmatprep.subr.bf16.mxu0 0
      %1690 = vmatpush1.bf16.msra.mxu0 %v1647
      %1691 = vmatprep.subr.bf16.mxu0 0
      %1692 = vmatpush2.bf16.msra.mxu0 0
      %1693 = vmatprep.subr.bf16.mxu0 0
      %1694 = vmatpush2.bf16.msra.mxu0 0
      %1695 = vmatprep.subr.bf16.mxu0 0
      %1696 = vmatpush2.bf16.msra.mxu0 0
      %1697 = vmatprep.subr.bf16.mxu0 0
      %1698 = vmatpush2.bf16.msra.mxu0 0
      %1699 = vmatprep.subr.bf16.mxu0 0
      %1700 = vmatpush2.bf16.msra.mxu0 0
      %1701 = vmatprep.subr.bf16.mxu0 0
      %1702 = vmatpush2.bf16.msra.mxu0 0
      %1703 = vmatprep.subr.bf16.mxu0 0
      %1704 = vmatpush2.bf16.msra.mxu0 0
      %1705 = vmatprep.subr.bf16.mxu0 0
      %1706 = vmatpush2.bf16.msra.mxu0 0
      %1707 = vmatprep.mubr.bf16.mxu0 0
      %1708 = vmatmul.mubr.bf16.gmra.mxu0 %v1652
      %v1709 = vpop.f32.mrf.mxu0
      %v1710 = vadd.f32 %v1638, %v1709
      %v1711 = vpop.f32.mrf.mxu0
      %v1712 = vpop.f32.mrf.mxu0
      %v1713 = vadd.f32 %v1638, %v1712
      %v1714 = vpop.f32.mrf.mxu0
      %1715 = vmatprep.mubr.bf16.mxu0 0
      %1716 = vmatmul.mubr.bf16.gmra.mxu0 %v1655
      %v1717 = vpop.f32.mrf.mxu0
      %v1718 = vadd.f32 %v1638, %v1717
      %v1719 = vpop.f32.mrf.mxu0
      %v1720 = vpop.f32.mrf.mxu0
      %v1721 = vadd.f32 %v1638, %v1720
      %v1722 = vpop.f32.mrf.mxu0
      %1723 = vmatprep.mubr.bf16.mxu0 0
      %1724 = vmatmul.mubr.bf16.gmra.mxu0 %v1658
      %v1725 = vpop.f32.mrf.mxu0
      %v1726 = vadd.f32 %v1638, %v1725
      %v1727 = vpop.f32.mrf.mxu0
      %v1728 = vpop.f32.mrf.mxu0
      %v1729 = vadd.f32 %v1638, %v1728
      %v1730 = vpop.f32.mrf.mxu0
      %1731 = vmatprep.mubr.bf16.mxu0 0
      %1732 = vmatmul.mubr.bf16.gmra.mxu0 %v1661
      %v1733 = vpop.f32.mrf.mxu0
      %v1734 = vadd.f32 %v1638, %v1733
      %v1735 = vpop.f32.mrf.mxu0
      %v1736 = vpop.f32.mrf.mxu0
      %v1737 = vadd.f32 %v1638, %v1736
      %v1738 = vpop.f32.mrf.mxu0
      %1739 = vmatprep.mubr.bf16.mxu0 0
      %1740 = vmatmul.mubr.bf16.gmra.mxu0 %v1664
      %v1741 = vpop.f32.mrf.mxu0
      %v1742 = vadd.f32 %v1638, %v1741
      %v1743 = vpop.f32.mrf.mxu0
      %v1744 = vpop.f32.mrf.mxu0
      %v1745 = vadd.f32 %v1638, %v1744
      %v1746 = vpop.f32.mrf.mxu0
      %1747 = vmatprep.mubr.bf16.mxu0 0
      %1748 = vmatmul.mubr.bf16.gmra.mxu0 %v1667
      %v1749 = vpop.f32.mrf.mxu0
      %v1750 = vadd.f32 %v1638, %v1749
      %v1751 = vpop.f32.mrf.mxu0
      %v1752 = vpop.f32.mrf.mxu0
      %v1753 = vadd.f32 %v1638, %v1752
      %v1754 = vpop.f32.mrf.mxu0
      %1755 = vmatprep.mubr.bf16.mxu0 0
      %1756 = vmatmul.mubr.bf16.gmra.mxu0 %v1670
      %v1757 = vpop.f32.mrf.mxu0
      %v1758 = vadd.f32 %v1638, %v1757
      %v1759 = vpop.f32.mrf.mxu0
      %v1760 = vpop.f32.mrf.mxu0
      %v1761 = vadd.f32 %v1638, %v1760
      %v1762 = vpop.f32.mrf.mxu0
      %1763 = vmatprep.mubr.bf16.mxu0 0
      %1764 = vmatmul.mubr.bf16.gmra.mxu0 %v1673
      %v1765 = vpop.f32.mrf.mxu0
      %v1766 = vadd.f32 %v1638, %v1765
      %v1767 = vpop.f32.mrf.mxu0
      %v1768 = vpop.f32.mrf.mxu0
      %v1769 = vadd.f32 %v1638, %v1768
      %v1770 = vpop.f32.mrf.mxu0
      %1771 = vdwg.mxu0
      %v1772 = vmax.f32 %v1710, 0.0
      %v1773 = vmax.f32 %v1713, 0.0
      %v1774 = vmax.f32 %v1718, 0.0
      %v1775 = vmax.f32 %v1721, 0.0
      %v1776 = vmax.f32 %v1726, 0.0
      %v1777 = vmax.f32 %v1729, 0.0
      %v1778 = vmax.f32 %v1734, 0.0
      %v1779 = vmax.f32 %v1737, 0.0
      %v1780 = vmax.f32 %v1742, 0.0
      %v1781 = vmax.f32 %v1745, 0.0
      %v1782 = vmax.f32 %v1750, 0.0
      %v1783 = vmax.f32 %v1753, 0.0
      %v1784 = vmax.f32 %v1758, 0.0
      %v1785 = vmax.f32 %v1761, 0.0
      %v1786 = vmax.f32 %v1766, 0.0
      %v1787 = vmax.f32 %v1769, 0.0
      %v1788 = vld [vmem:[%s1 + $0x90] sm:$0xf]
      %v1789 = vld [vmem:[%s1 + $0x94] sm:$0xf]
      %v1790 = vld [vmem:[%s1 + $0x98] sm:$0xf]
      %v1791 = vld [vmem:[%s1 + $0x9c] sm:$0xf]
      %v1792 = vld [vmem:[%s2 + $0x38] sm:$0x1]
      %v1793 = vpack.c.bf16 %v1773, %v1772
      %v1794 = vpack.c.bf16 %v1775, %v1774
      %v1795 = vpack.c.bf16 %v1777, %v1776
      %v1796 = vpack.c.bf16 %v1779, %v1778
      %v1797 = vpack.c.bf16 %v1781, %v1780
      %v1798 = vpack.c.bf16 %v1783, %v1782
      %v1799 = vpack.c.bf16 %v1785, %v1784
      %v1800 = vpack.c.bf16 %v1787, %v1786
      %v1801 = vlaneseq
      %v1802 = vshrl.u32 %v1801, 7
      %v1803 = vsub.s32 0, %v1802
      %v1804 = vrot.slane %v1792, %v1803
      %v1809 = vunpack.c.l.b16 %v1788
      %v1810 = vunpack.c.l.b16 %v1789
      %v1811 = vunpack.c.l.b16 %v1790
      %v1812 = vunpack.c.l.b16 %v1791
      %v1813 = vpack.c.b16 %v1810, %v1809
      %v1814 = vpack.c.b16 %v1812, %v1811
      %v1818 = vsel %vm462, %v1793, 0
      %v1821 = vsel %vm462, %v1794, 0
      %v1824 = vsel %vm462, %v1795, 0
      %v1827 = vsel %vm462, %v1796, 0
      %v1830 = vsel %vm462, %v1797, 0
      %v1833 = vsel %vm462, %v1798, 0
      %v1836 = vsel %vm462, %v1799, 0
      %v1839 = vsel %vm462, %v1800, 0
      %1841 = vmatprep.subr.bf16.mxu0 0
      %1842 = vmatpush1.bf16.msra.mxu0 0
      %1843 = vmatprep.subr.bf16.mxu0 0
      %1844 = vmatpush1.bf16.msra.mxu0 0
      %1845 = vmatprep.subr.bf16.mxu0 0
      %1846 = vmatpush1.bf16.msra.mxu0 0
      %1847 = vmatprep.subr.bf16.mxu0 0
      %1848 = vmatpush1.bf16.msra.mxu0 0
      %1849 = vmatprep.subr.bf16.mxu0 0
      %1850 = vmatpush1.bf16.msra.mxu0 0
      %1851 = vmatprep.subr.bf16.mxu0 0
      %1852 = vmatpush1.bf16.msra.mxu0 0
      %1853 = vmatprep.subr.bf16.mxu0 0
      %1854 = vmatpush1.bf16.msra.mxu0 %v1814
      %1855 = vmatprep.subr.bf16.mxu0 0
      %1856 = vmatpush1.bf16.msra.mxu0 %v1813
      %1857 = vmatprep.subr.bf16.mxu0 0
      %1858 = vmatpush2.bf16.msra.mxu0 0
      %1859 = vmatprep.subr.bf16.mxu0 0
      %1860 = vmatpush2.bf16.msra.mxu0 0
      %1861 = vmatprep.subr.bf16.mxu0 0
      %1862 = vmatpush2.bf16.msra.mxu0 0
      %1863 = vmatprep.subr.bf16.mxu0 0
      %1864 = vmatpush2.bf16.msra.mxu0 0
      %1865 = vmatprep.subr.bf16.mxu0 0
      %1866 = vmatpush2.bf16.msra.mxu0 0
      %1867 = vmatprep.subr.bf16.mxu0 0
      %1868 = vmatpush2.bf16.msra.mxu0 0
      %1869 = vmatprep.subr.bf16.mxu0 0
      %1870 = vmatpush2.bf16.msra.mxu0 0
      %1871 = vmatprep.subr.bf16.mxu0 0
      %1872 = vmatpush2.bf16.msra.mxu0 0
      %1873 = vmatprep.mubr.bf16.mxu0 0
      %1874 = vmatmul.mubr.bf16.gmra.mxu0 %v1818
      %v1875 = vpop.f32.mrf.mxu0
      %v1876 = vadd.f32 %v1804, %v1875
      %v1877 = vpop.f32.mrf.mxu0
      %v1878 = vpop.f32.mrf.mxu0
      %v1879 = vadd.f32 %v1804, %v1878
      %v1880 = vpop.f32.mrf.mxu0
      %1881 = vmatprep.mubr.bf16.mxu0 0
      %1882 = vmatmul.mubr.bf16.gmra.mxu0 %v1821
      %v1883 = vpop.f32.mrf.mxu0
      %v1884 = vadd.f32 %v1804, %v1883
      %v1885 = vpop.f32.mrf.mxu0
      %v1886 = vpop.f32.mrf.mxu0
      %v1887 = vadd.f32 %v1804, %v1886
      %v1888 = vpop.f32.mrf.mxu0
      %1889 = vmatprep.mubr.bf16.mxu0 0
      %1890 = vmatmul.mubr.bf16.gmra.mxu0 %v1824
      %v1891 = vpop.f32.mrf.mxu0
      %v1892 = vadd.f32 %v1804, %v1891
      %v1893 = vpop.f32.mrf.mxu0
      %v1894 = vpop.f32.mrf.mxu0
      %v1895 = vadd.f32 %v1804, %v1894
      %v1896 = vpop.f32.mrf.mxu0
      %1897 = vmatprep.mubr.bf16.mxu0 0
      %1898 = vmatmul.mubr.bf16.gmra.mxu0 %v1827
      %v1899 = vpop.f32.mrf.mxu0
      %v1900 = vadd.f32 %v1804, %v1899
      %v1901 = vpop.f32.mrf.mxu0
      %v1902 = vpop.f32.mrf.mxu0
      %v1903 = vadd.f32 %v1804, %v1902
      %v1904 = vpop.f32.mrf.mxu0
      %1905 = vmatprep.mubr.bf16.mxu0 0
      %1906 = vmatmul.mubr.bf16.gmra.mxu0 %v1830
      %v1907 = vpop.f32.mrf.mxu0
      %v1908 = vadd.f32 %v1804, %v1907
      %v1909 = vpop.f32.mrf.mxu0
      %v1910 = vpop.f32.mrf.mxu0
      %v1911 = vadd.f32 %v1804, %v1910
      %v1912 = vpop.f32.mrf.mxu0
      %1913 = vmatprep.mubr.bf16.mxu0 0
      %1914 = vmatmul.mubr.bf16.gmra.mxu0 %v1833
      %v1915 = vpop.f32.mrf.mxu0
      %v1916 = vadd.f32 %v1804, %v1915
      %v1917 = vpop.f32.mrf.mxu0
      %v1918 = vpop.f32.mrf.mxu0
      %v1919 = vadd.f32 %v1804, %v1918
      %v1920 = vpop.f32.mrf.mxu0
      %1921 = vmatprep.mubr.bf16.mxu0 0
      %1922 = vmatmul.mubr.bf16.gmra.mxu0 %v1836
      %v1923 = vpop.f32.mrf.mxu0
      %v1924 = vadd.f32 %v1804, %v1923
      %v1925 = vpop.f32.mrf.mxu0
      %v1926 = vpop.f32.mrf.mxu0
      %v1927 = vadd.f32 %v1804, %v1926
      %v1928 = vpop.f32.mrf.mxu0
      %1929 = vmatprep.mubr.bf16.mxu0 0
      %1930 = vmatmul.mubr.bf16.gmra.mxu0 %v1839
      %v1931 = vpop.f32.mrf.mxu0
      %v1932 = vadd.f32 %v1804, %v1931
      %v1933 = vpop.f32.mrf.mxu0
      %v1934 = vpop.f32.mrf.mxu0
      %v1935 = vadd.f32 %v1804, %v1934
      %v1936 = vpop.f32.mrf.mxu0
      %1937 = vdwg.mxu0
      %v1938 = vmax.f32 %v1876, 0.0
      %v1939 = vmax.f32 %v1879, 0.0
      %v1940 = vmax.f32 %v1884, 0.0
      %v1941 = vmax.f32 %v1887, 0.0
      %v1942 = vmax.f32 %v1892, 0.0
      %v1943 = vmax.f32 %v1895, 0.0
      %v1944 = vmax.f32 %v1900, 0.0
      %v1945 = vmax.f32 %v1903, 0.0
      %v1946 = vmax.f32 %v1908, 0.0
      %v1947 = vmax.f32 %v1911, 0.0
      %v1948 = vmax.f32 %v1916, 0.0
      %v1949 = vmax.f32 %v1919, 0.0
      %v1950 = vmax.f32 %v1924, 0.0
      %v1951 = vmax.f32 %v1927, 0.0
      %v1952 = vmax.f32 %v1932, 0.0
      %v1953 = vmax.f32 %v1935, 0.0
      %v1954 = vld [vmem:[%s1 + $0xa0] sm:$0xf]
      %v1955 = vld [vmem:[%s1 + $0xa4] sm:$0xf]
      %v1956 = vld [vmem:[%s1 + $0xa8] sm:$0xf]
      %v1957 = vld [vmem:[%s1 + $0xac] sm:$0xf]
      %v1958 = vld [vmem:[%s2 + $0x40] sm:$0x1]
      %v1959 = vpack.c.bf16 %v1939, %v1938
      %v1960 = vpack.c.bf16 %v1941, %v1940
      %v1961 = vpack.c.bf16 %v1943, %v1942
      %v1962 = vpack.c.bf16 %v1945, %v1944
      %v1963 = vpack.c.bf16 %v1947, %v1946
      %v1964 = vpack.c.bf16 %v1949, %v1948
      %v1965 = vpack.c.bf16 %v1951, %v1950
      %v1966 = vpack.c.bf16 %v1953, %v1952
      %v1967 = vlaneseq
      %v1968 = vshrl.u32 %v1967, 7
      %v1969 = vsub.s32 0, %v1968
      %v1970 = vrot.slane %v1958, %v1969
      %v1975 = vunpack.c.l.b16 %v1954
      %v1976 = vunpack.c.l.b16 %v1955
      %v1977 = vunpack.c.l.b16 %v1956
      %v1978 = vunpack.c.l.b16 %v1957
      %v1979 = vpack.c.b16 %v1976, %v1975
      %v1980 = vpack.c.b16 %v1978, %v1977
      %v1984 = vsel %vm462, %v1959, 0
      %v1987 = vsel %vm462, %v1960, 0
      %v1990 = vsel %vm462, %v1961, 0
      %v1993 = vsel %vm462, %v1962, 0
      %v1996 = vsel %vm462, %v1963, 0
      %v1999 = vsel %vm462, %v1964, 0
      %v2002 = vsel %vm462, %v1965, 0
      %v2005 = vsel %vm462, %v1966, 0
      %2007 = vmatprep.subr.bf16.mxu0 0
      %2008 = vmatpush1.bf16.msra.mxu0 0
      %2009 = vmatprep.subr.bf16.mxu0 0
      %2010 = vmatpush1.bf16.msra.mxu0 0
      %2011 = vmatprep.subr.bf16.mxu0 0
      %2012 = vmatpush1.bf16.msra.mxu0 0
      %2013 = vmatprep.subr.bf16.mxu0 0
      %2014 = vmatpush1.bf16.msra.mxu0 0
      %2015 = vmatprep.subr.bf16.mxu0 0
      %2016 = vmatpush1.bf16.msra.mxu0 0
      %2017 = vmatprep.subr.bf16.mxu0 0
      %2018 = vmatpush1.bf16.msra.mxu0 0
      %2019 = vmatprep.subr.bf16.mxu0 0
      %2020 = vmatpush1.bf16.msra.mxu0 %v1980
      %2021 = vmatprep.subr.bf16.mxu0 0
      %2022 = vmatpush1.bf16.msra.mxu0 %v1979
      %2023 = vmatprep.subr.bf16.mxu0 0
      %2024 = vmatpush2.bf16.msra.mxu0 0
      %2025 = vmatprep.subr.bf16.mxu0 0
      %2026 = vmatpush2.bf16.msra.mxu0 0
      %2027 = vmatprep.subr.bf16.mxu0 0
      %2028 = vmatpush2.bf16.msra.mxu0 0
      %2029 = vmatprep.subr.bf16.mxu0 0
      %2030 = vmatpush2.bf16.msra.mxu0 0
      %2031 = vmatprep.subr.bf16.mxu0 0
      %2032 = vmatpush2.bf16.msra.mxu0 0
      %2033 = vmatprep.subr.bf16.mxu0 0
      %2034 = vmatpush2.bf16.msra.mxu0 0
      %2035 = vmatprep.subr.bf16.mxu0 0
      %2036 = vmatpush2.bf16.msra.mxu0 0
      %2037 = vmatprep.subr.bf16.mxu0 0
      %2038 = vmatpush2.bf16.msra.mxu0 0
      %2039 = vmatprep.mubr.bf16.mxu0 0
      %2040 = vmatmul.mubr.bf16.gmra.mxu0 %v1984
      %v2041 = vpop.f32.mrf.mxu0
      %v2042 = vadd.f32 %v1970, %v2041
      %v2043 = vpop.f32.mrf.mxu0
      %v2044 = vpop.f32.mrf.mxu0
      %v2045 = vadd.f32 %v1970, %v2044
      %v2046 = vpop.f32.mrf.mxu0
      %2047 = vmatprep.mubr.bf16.mxu0 0
      %2048 = vmatmul.mubr.bf16.gmra.mxu0 %v1987
      %v2049 = vpop.f32.mrf.mxu0
      %v2050 = vadd.f32 %v1970, %v2049
      %v2051 = vpop.f32.mrf.mxu0
      %v2052 = vpop.f32.mrf.mxu0
      %v2053 = vadd.f32 %v1970, %v2052
      %v2054 = vpop.f32.mrf.mxu0
      %2055 = vmatprep.mubr.bf16.mxu0 0
      %2056 = vmatmul.mubr.bf16.gmra.mxu0 %v1990
      %v2057 = vpop.f32.mrf.mxu0
      %v2058 = vadd.f32 %v1970, %v2057
      %v2059 = vpop.f32.mrf.mxu0
      %v2060 = vpop.f32.mrf.mxu0
      %v2061 = vadd.f32 %v1970, %v2060
      %v2062 = vpop.f32.mrf.mxu0
      %2063 = vmatprep.mubr.bf16.mxu0 0
      %2064 = vmatmul.mubr.bf16.gmra.mxu0 %v1993
      %v2065 = vpop.f32.mrf.mxu0
      %v2066 = vadd.f32 %v1970, %v2065
      %v2067 = vpop.f32.mrf.mxu0
      %v2068 = vpop.f32.mrf.mxu0
      %v2069 = vadd.f32 %v1970, %v2068
      %v2070 = vpop.f32.mrf.mxu0
      %2071 = vmatprep.mubr.bf16.mxu0 0
      %2072 = vmatmul.mubr.bf16.gmra.mxu0 %v1996
      %v2073 = vpop.f32.mrf.mxu0
      %v2074 = vadd.f32 %v1970, %v2073
      %v2075 = vpop.f32.mrf.mxu0
      %v2076 = vpop.f32.mrf.mxu0
      %v2077 = vadd.f32 %v1970, %v2076
      %v2078 = vpop.f32.mrf.mxu0
      %2079 = vmatprep.mubr.bf16.mxu0 0
      %2080 = vmatmul.mubr.bf16.gmra.mxu0 %v1999
      %v2081 = vpop.f32.mrf.mxu0
      %v2082 = vadd.f32 %v1970, %v2081
      %v2083 = vpop.f32.mrf.mxu0
      %v2084 = vpop.f32.mrf.mxu0
      %v2085 = vadd.f32 %v1970, %v2084
      %v2086 = vpop.f32.mrf.mxu0
      %2087 = vmatprep.mubr.bf16.mxu0 0
      %2088 = vmatmul.mubr.bf16.gmra.mxu0 %v2002
      %v2089 = vpop.f32.mrf.mxu0
      %v2090 = vadd.f32 %v1970, %v2089
      %v2091 = vpop.f32.mrf.mxu0
      %v2092 = vpop.f32.mrf.mxu0
      %v2093 = vadd.f32 %v1970, %v2092
      %v2094 = vpop.f32.mrf.mxu0
      %2095 = vmatprep.mubr.bf16.mxu0 0
      %2096 = vmatmul.mubr.bf16.gmra.mxu0 %v2005
      %v2097 = vpop.f32.mrf.mxu0
      %v2098 = vadd.f32 %v1970, %v2097
      %v2099 = vpop.f32.mrf.mxu0
      %v2100 = vpop.f32.mrf.mxu0
      %v2101 = vadd.f32 %v1970, %v2100
      %v2102 = vpop.f32.mrf.mxu0
      %2103 = vdwg.mxu0
      %v2104 = vadd.f32 %v1510, %v2042
      %v2105 = vadd.f32 %v1511, %v2045
      %v2106 = vadd.f32 %v1512, %v2050
      %v2107 = vadd.f32 %v1513, %v2053
      %v2108 = vadd.f32 %v1514, %v2058
      %v2109 = vadd.f32 %v1515, %v2061
      %v2110 = vadd.f32 %v1516, %v2066
      %v2111 = vadd.f32 %v1517, %v2069
      %v2112 = vadd.f32 %v1518, %v2074
      %v2113 = vadd.f32 %v1519, %v2077
      %v2114 = vadd.f32 %v1520, %v2082
      %v2115 = vadd.f32 %v1521, %v2085
      %v2116 = vadd.f32 %v1522, %v2090
      %v2117 = vadd.f32 %v1523, %v2093
      %v2118 = vadd.f32 %v1524, %v2098
      %v2119 = vadd.f32 %v1525, %v2101
      %2120 = vst [vmem:[%s172] sm:$0xff] %v2104
      %2121 = vst [vmem:[%s172 + $0x8] sm:$0xff] %v2105
      %2122 = vst [vmem:[%s172 + $0x10] sm:$0xff] %v2106
      %2123 = vst [vmem:[%s172 + $0x18] sm:$0xff] %v2107
      %2124 = vst [vmem:[%s172 + $0x20] sm:$0xff] %v2108
      %2125 = vst [vmem:[%s172 + $0x28] sm:$0xff] %v2109
      %2126 = vst [vmem:[%s172 + $0x30] sm:$0xff] %v2110
      %2127 = vst [vmem:[%s172 + $0x38] sm:$0xff] %v2111
      %2128 = vst [vmem:[%s172 + $0x40] sm:$0xff] %v2112
      %2129 = vst [vmem:[%s172 + $0x48] sm:$0xff] %v2113
      %2130 = vst [vmem:[%s172 + $0x50] sm:$0xff] %v2114
      %2131 = vst [vmem:[%s172 + $0x58] sm:$0xff] %v2115
      %2132 = vst [vmem:[%s172 + $0x60] sm:$0xff] %v2116
      %2133 = vst [vmem:[%s172 + $0x68] sm:$0xff] %v2117
      %2134 = vst [vmem:[%s172 + $0x70] sm:$0xff] %v2118
      %2135 = vst [vmem:[%s172 + $0x78] sm:$0xff] %v2119
      %s2136 = smul.u32 16, %s14
      %p2137 = scmp.lt.s32.totalorder %s2136, 31
      %s2138 = scalar_select %p2137, %s2136, 31
      %s2139 = smul.addr %s2138, 8
      %s2140 = scalar_lea.vmem %s3, %s2139
      // Predicated region
      $region33: #{nhits_forward.1} parent=31 // pred_check
        %p2141 = pneg %p100
      $region34: #{nhits_forward.1} parent=31 // pred_check_branch
        %2143 = sbr.rel (%p2141) target = $region36
      $region35: #{nhits_forward.1} parent=31 // pred_region
        %s2144 = smul.u32 16, %s14
      $region36: #{nhits_forward.1} parent=31 // pred_fallthru
        _
    $region32: #{nhits_forward.1} parent=5 // pred_fallthru
      _
    %p2145 = scmp.le.s32.totalorder 2, %s9
    // Predicated region
    $region37: #{nhits_forward.1} parent=5 // pred_check
      %p2146 = pneg %p2145
    $region38: #{nhits_forward.1} parent=5 // pred_check_branch
      %2148 = sbr.rel (%p2146) target = $region40
    $region39: #{nhits_forward.1} parent=5 // pred_region
      %s2149 = ssub.s32 %s9, 2
      // Predicated region
      $region41: #{nhits_forward.1} parent=39 // pred_check
        %p2150 = pneg %p106
      $region42: #{nhits_forward.1} parent=39 // pred_check_branch
        %2152 = sbr.rel (%p2150) target = $region44
      $region43: #{nhits_forward.1} parent=39 // pred_region
        %s2153 = smul.u32 16, %s15
        %p2154 = scmp.lt.s32.totalorder %s2153, 31
        %s2155 = scalar_select %p2154, %s2153, 31
        %s2156 = smul.addr %s2155, 8
        %s2157 = scalar_lea.vmem %s3, %s2156
      $region44: #{nhits_forward.1} parent=39 // pred_fallthru
        _
    $region40: #{nhits_forward.1} parent=5 // pred_fallthru
      _
  $region6: #{nhits_forward.1} parent=0 // loop_footer
    %s13 = sadd.s32 1, %s9
  $region7: #{nhits_forward.1} parent=0 // loop_footer_branch
    %8 = sbr.rel target = $region3
  $region8: #{nhits_forward.1} parent=0 // loop_exit
    _

</llo_original>
